<compile_context>
chip_gen: v6e
topology: v6e:2x2x1
jax: 0.10.0
libtpu: 0.0.40
codegen_flags: <defaults>
</compile_context>

<pallas_src>
import jax
import jax.numpy as jnp
from jax.experimental import pallas as pl
from jax.experimental.pallas import tpu as pltpu

NHID_CTX = 64          # self.nhid_ctx
NHID_LANG = 128        # self.nhid_lang
NEMBED_WORD = 128      # self.nembed_word
NEMBED_CTX = 64        # ctx encoder embedding size (3rd ctor arg)
CTX_PAIRS = 3          # ObjectDivisionDomain().input_length()
CTX_K = CTX_PAIRS * 2  # domain.input_length() * 2 == 6
OUTCOME_LEN = 3        # 3 outcome tokens concatenated to lang_h
CHUNK = 8              # examples per grid step (fills the 8 sublanes)


def rnn_forward_kernel(ctx_feat_ref, ctx_w_ref, ctx_b_ref,
                       xseq_ref,
                       w_ih_ref, w_hh_ref, b_gates_ref, b_hn_ref,
                       outc_ref, w_out_h_ref, w_out_o_ref, b_out_ref,
                       out_ref):
    """Forward pass for one chunk of BC examples.

    ctx_feat : (BC, 384) f32   raw ctx-encoder features (pre-Tanh)
    ctx_w    : (384, 64) bf16 ; w_ih : (192, 384) bf16 ; w_hh : (128, 384) bf16
    xseq     : (T*BC, 128) f32 word embeddings, time-major within the chunk
               (row = t*BC + b_local)
    b_gates  : (1, 384) f32    b_ih + [b_hr | b_hz | 0]   (precomputed)
    b_hn     : (1, 128) f32
    outc     : (BC, 3) f32     outcome token indices
    w_out_h  : (128, 2) f32 ;  w_out_o : (3, 2) f32 ; b_out : (1, 2) f32
    out      : (BC, 2) f32
    """
    f32 = jnp.float32
    bf16 = jnp.bfloat16
    H = NHID_LANG
    BC = ctx_feat_ref.shape[0]
    T = xseq_ref.shape[0] // BC

    # bf16 weights go straight into the MXU (f32 accumulation) -- no upcast.
    w_ih = w_ih_ref[...]                                              # (192, 384) bf16
    w_ih_word = w_ih[:NEMBED_WORD, :]                                 # (128, 384)
    w_ih_ctx = w_ih[NEMBED_WORD:, :]                                  # (64, 384)
    w_hh = w_hh_ref[...]                                              # (128, 384) bf16

    # ---- MlpContextEncoder tail: Tanh -> Linear(384, 64) --------------------
    ctx_h = (jnp.dot(jnp.tanh(ctx_feat_ref[...]).astype(bf16), ctx_w_ref[...],
                     preferred_element_type=f32)
             + ctx_b_ref[...])                                        # (BC, 64) f32

    # ---- nn.GRU(input=192, hidden=128), gate order r, z, n (PyTorch) --------
    # Per-example gate bias (ctx contribution + b_ih + folded b_hr/b_hz).
    gi_bias = (jnp.dot(ctx_h.astype(bf16), w_ih_ctx, preferred_element_type=f32)
               + b_gates_ref[...])                                    # (BC, 384)
    b_hn = b_hn_ref[...]                                              # (1, 128)

    # Input-side projection hoisted out of the recurrence: all T steps at once.
    gi_all = jnp.dot(xseq_ref[...].astype(bf16), w_ih_word,
                     preferred_element_type=f32)                      # (T*BC, 384)

    h = jnp.zeros((BC, H), f32)                                       # zero_hid
    # T is static -> fully unrolled; only h @ W_hh + the gate math are serial.
    for t in range(T):
        gi = gi_all[t * BC:(t + 1) * BC, :] + gi_bias                 # off h-chain
        gh = jnp.dot(h.astype(bf16), w_hh, preferred_element_type=f32)  # (BC, 384)
        rz = jax.nn.sigmoid(gi[:, :2 * H] + gh[:, :2 * H])            # one EUP slab
        r = rz[:, :H]
        z = rz[:, H:]
        n = jnp.tanh(gi[:, 2 * H:] + r * (gh[:, 2 * H:] + b_hn))
        h = n + z * (h - n)                                           # == (1-z)*n + z*h

    # ---- outcome head: Tanh -> Linear(131, 2), split into aligned operands --
    # Matches the reference: raw outcome token ids concatenated with lang_h and
    # passed through Tanh -> Linear.
    out_ref[...] = (jnp.dot(jnp.tanh(h), w_out_h_ref[...],
                            preferred_element_type=f32)
                    + jnp.dot(jnp.tanh(outc_ref[...]), w_out_o_ref[...],
                              preferred_element_type=f32)
                    + b_out_ref[...])


def init_params(key, n_ctx_vocab, n_word_vocab):
    ks = jax.random.split(key, 11)
    s = 0.1
    u = lambda k, shape: jax.random.uniform(k, shape, jnp.float32, -s, s)
    bf16 = jnp.bfloat16
    return dict(
        cnt_emb=u(ks[0], (n_ctx_vocab, NEMBED_CTX)),
        val_emb=u(ks[1], (n_ctx_vocab, NEMBED_CTX)),
        # Big matrices stored bf16 (half the DMA bytes); fed to the MXU as-is.
        ctx_w=u(ks[2], (CTX_K * NEMBED_CTX, NHID_CTX)).astype(bf16),  # Linear(384, 64)
        ctx_b=u(ks[3], (1, NHID_CTX)),
        word_emb=u(ks[4], (n_word_vocab, NEMBED_WORD)),
        # GRU weights stored transposed w.r.t. torch so the kernel does x @ W;
        # columns keep PyTorch's r|z|n block ordering.
        w_ih=u(ks[5], (NEMBED_WORD + NHID_CTX, 3 * NHID_LANG)).astype(bf16),  # (192, 384)
        w_hh=u(ks[6], (NHID_LANG, 3 * NHID_LANG)).astype(bf16),               # (128, 384)
        b_ih=u(ks[7], (1, 3 * NHID_LANG)),
        b_hh=u(ks[8], (1, 3 * NHID_LANG)),
        w_out_h=u(ks[9], (NHID_LANG, 2)),                             # Linear rows 0:128
        w_out_o=u(ks[10], (OUTCOME_LEN, 2)),                          # Linear rows 128:131
        b_out=jnp.zeros((1, 2), jnp.float32),
    )


def _nbytes(x):
    return int(x.size) * int(x.dtype.itemsize)


def rnn_forward(params, ctx_idx, token_seq, outcome_idx, *, chunk=CHUNK):
    """Batched forward: row b of each input is one independent reference forward.

    ctx_idx    : (B, 6)  int   context tokens (3 count/value pairs)
    token_seq  : (B, T)  int   flattened dialogue tokens ([prefix, cda] pairs)
    outcome_idx: (B, 3)  int   outcome tokens
    returns    : (B, 2)  f32
    """
    B, T = token_seq.shape
    BC = chunk
    n_chunks = pl.cdiv(B, BC)
    B_pad = n_chunks * BC

    # -- embedding gathers + tiny bias folds are XLA glue ----------------------
    cnt = params['cnt_emb'][ctx_idx[:, 0::2]]                 # (B, 3, 64) counts
    val = params['val_emb'][ctx_idx[:, 1::2]]                 # (B, 3, 64) values
    # TODO(synk): modules.MlpContextEncoder source is not in the prompt; using
    # per-pair [cnt || val] embedding features flattened to (B, 384) so
    # Linear(k*nembed, nhid) from the ctor is dimensionally consistent.
    ctx_feat = jnp.concatenate([cnt, val], axis=2).reshape(B, CTX_K * NEMBED_CTX)

    x_emb = params['word_emb'][token_seq]                     # (B, T, 128)
    outc = outcome_idx.astype(jnp.float32).reshape(B, OUTCOME_LEN)

    if B_pad != B:
        pad = B_pad - B
        ctx_feat = jnp.pad(ctx_feat, ((0, pad), (0, 0)))
        x_emb = jnp.pad(x_emb, ((0, pad), (0, 0), (0, 0)))
        outc = jnp.pad(outc, ((0, pad), (0, 0)))

    # time-major within each chunk of BC examples: row = chunk*(T*BC) + t*BC + b
    x_seq = (x_emb.reshape(n_chunks, BC, T, NEMBED_WORD)
             .transpose(0, 2, 1, 3)
             .reshape(n_chunks * T * BC, NEMBED_WORD))

    # Fold the r/z thirds of b_hh into the precomputed gate bias; keep b_hn
    # separate (it must stay inside the r*(...) product).
    b_gates = params['b_ih'] + params['b_hh'].at[:, 2 * NHID_LANG:].set(0.0)
    b_hn = params['b_hh'][:, 2 * NHID_LANG:]

    operands = (ctx_feat, params['ctx_w'], params['ctx_b'],
                x_seq,
                params['w_ih'], params['w_hh'], b_gates, b_hn,
                outc, params['w_out_h'], params['w_out_o'], params['b_out'])

    flops = 2 * B_pad * (CTX_K * NEMBED_CTX * NHID_CTX            # ctx Linear
                         + NHID_CTX * 3 * NHID_LANG               # ctx -> gate bias
                         + T * NEMBED_WORD * 3 * NHID_LANG        # hoisted input proj
                         + T * NHID_LANG * 3 * NHID_LANG          # recurrence
                         + (NHID_LANG + OUTCOME_LEN) * 2)         # outcome Linear
    transcendentals = B_pad * (CTX_K * NEMBED_CTX + T * 3 * NHID_LANG
                               + NHID_LANG + OUTCOME_LEN)
    bytes_accessed = sum(_nbytes(a) for a in operands) + B_pad * 2 * 4

    out = pl.pallas_call(
        rnn_forward_kernel,
        out_shape=jax.ShapeDtypeStruct((B_pad, 2), jnp.float32),
        grid=(n_chunks,),
        in_specs=[
            pl.BlockSpec((BC, CTX_K * NEMBED_CTX), lambda i: (i, 0)),          # ctx_feat
            pl.BlockSpec((CTX_K * NEMBED_CTX, NHID_CTX), lambda i: (0, 0)),    # ctx_w (resident)
            pl.BlockSpec((1, NHID_CTX), lambda i: (0, 0)),                     # ctx_b
            pl.BlockSpec((T * BC, NEMBED_WORD), lambda i: (i, 0)),             # xseq chunk
            pl.BlockSpec((NEMBED_WORD + NHID_CTX, 3 * NHID_LANG),
                         lambda i: (0, 0)),                                    # w_ih (resident)
            pl.BlockSpec((NHID_LANG, 3 * NHID_LANG), lambda i: (0, 0)),        # w_hh (resident)
            pl.BlockSpec((1, 3 * NHID_LANG), lambda i: (0, 0)),                # b_gates
            pl.BlockSpec((1, NHID_LANG), lambda i: (0, 0)),                    # b_hn
            pl.BlockSpec((BC, OUTCOME_LEN), lambda i: (i, 0)),                 # outcome ids
            pl.BlockSpec((NHID_LANG, 2), lambda i: (0, 0)),                    # w_out_h
            pl.BlockSpec((OUTCOME_LEN, 2), lambda i: (0, 0)),                  # w_out_o
            pl.BlockSpec((1, 2), lambda i: (0, 0)),                            # b_out
        ],
        out_specs=pl.BlockSpec((BC, 2), lambda i: (i, 0)),
        compiler_params=pltpu.CompilerParams(
            dimension_semantics=("parallel",)),
        cost_estimate=pl.CostEstimate(flops=flops,
                                      transcendentals=transcendentals,
                                      bytes_accessed=bytes_accessed),
    )(*operands)
    return out[:B]


if __name__ == "__main__":
    key = jax.random.PRNGKey(0)
    pk, dk1, dk2, dk3 = jax.random.split(key, 4)

    n_ctx_vocab, n_word_vocab = 16, 32
    params = init_params(pk, n_ctx_vocab, n_word_vocab)

    B = 16            # independent examples batched into one launch
    num_inputs = 4    # dialogue dicts per example -> T = 8 tokens
    T = 2 * num_inputs

    ctx_idx = jax.random.randint(dk1, (B, CTX_K), 0, n_ctx_vocab)
    token_seq = jax.random.randint(dk2, (B, T), 0, n_word_vocab)
    outcome_idx = jax.random.randint(dk3, (B, OUTCOME_LEN), 0, n_ctx_vocab)

    out = jax.jit(rnn_forward)(params, ctx_idx, token_seq, outcome_idx)
    out = jax.block_until_ready(out)
    assert out.shape == (B, 2) and out.dtype == jnp.float32
    print("KERNEL_OK")
</pallas_src>

<mosaic_0001>
module attributes {stable_mosaic.version = 11 : i64} {
  func.func @rnn_forward_kernel(%arg0: i32, %arg1: memref<8x384xf32, #tpu.memory_space<vmem>>, %arg2: memref<384x64xbf16, #tpu.memory_space<vmem>>, %arg3: memref<1x64xf32, #tpu.memory_space<vmem>>, %arg4: memref<64x128xf32, #tpu.memory_space<vmem>>, %arg5: memref<192x384xbf16, #tpu.memory_space<vmem>>, %arg6: memref<128x384xbf16, #tpu.memory_space<vmem>>, %arg7: memref<1x384xf32, #tpu.memory_space<vmem>>, %arg8: memref<1x128xf32, #tpu.memory_space<vmem>>, %arg9: memref<8x3xf32, #tpu.memory_space<vmem>>, %arg10: memref<128x2xf32, #tpu.memory_space<vmem>>, %arg11: memref<3x2xf32, #tpu.memory_space<vmem>>, %arg12: memref<1x2xf32, #tpu.memory_space<vmem>>, %arg13: memref<8x2xf32, #tpu.memory_space<vmem>>) attributes {dimension_semantics = [#tpu.dimension_semantics<parallel>], iteration_bounds = array<i64: 2>, scalar_prefetch = 0 : i64, scratch_operands = 0 : i64, tpu.core_type = #tpu.core_type<tc>, window_params = [{transform_indices = @transform_0, window_bounds = array<i64: 8, 384>}, {pipeline_mode = #tpu.pipeline_mode<synchronous>, transform_indices = @transform_1, window_bounds = array<i64: 384, 64>}, {pipeline_mode = #tpu.pipeline_mode<synchronous>, transform_indices = @transform_2, window_bounds = array<i64: 1, 64>}, {transform_indices = @transform_3, window_bounds = array<i64: 64, 128>}, {pipeline_mode = #tpu.pipeline_mode<synchronous>, transform_indices = @transform_4, window_bounds = array<i64: 192, 384>}, {pipeline_mode = #tpu.pipeline_mode<synchronous>, transform_indices = @transform_5, window_bounds = array<i64: 128, 384>}, {pipeline_mode = #tpu.pipeline_mode<synchronous>, transform_indices = @transform_6, window_bounds = array<i64: 1, 384>}, {pipeline_mode = #tpu.pipeline_mode<synchronous>, transform_indices = @transform_7, window_bounds = array<i64: 1, 128>}, {transform_indices = @transform_8, window_bounds = array<i64: 8, 3>}, {pipeline_mode = #tpu.pipeline_mode<synchronous>, transform_indices = @transform_9, window_bounds = array<i64: 128, 2>}, {pipeline_mode = #tpu.pipeline_mode<synchronous>, transform_indices = @transform_10, window_bounds = array<i64: 3, 2>}, {pipeline_mode = #tpu.pipeline_mode<synchronous>, transform_indices = @transform_11, window_bounds = array<i64: 1, 2>}, {transform_indices = @transform_12, window_bounds = array<i64: 8, 2>}]} {
    %c0 = arith.constant 0 : index
    %c0_0 = arith.constant 0 : index
    %0 = vector.load %arg5[%c0, %c0_0] : memref<192x384xbf16, #tpu.memory_space<vmem>>, vector<192x384xbf16>
    %1 = vector.extract_strided_slice %0 {offsets = [0, 0], sizes = [128, 384], strides = [1, 1]} : vector<192x384xbf16> to vector<128x384xbf16>
    %2 = vector.extract_strided_slice %0 {offsets = [128, 0], sizes = [64, 384], strides = [1, 1]} : vector<192x384xbf16> to vector<64x384xbf16>
    %c0_1 = arith.constant 0 : index
    %c0_2 = arith.constant 0 : index
    %3 = vector.load %arg6[%c0_1, %c0_2] : memref<128x384xbf16, #tpu.memory_space<vmem>>, vector<128x384xbf16>
    %c0_3 = arith.constant 0 : index
    %c0_4 = arith.constant 0 : index
    %4 = vector.load %arg1[%c0_3, %c0_4] : memref<8x384xf32, #tpu.memory_space<vmem>>, vector<8x384xf32>
    %5 = math.tanh %4 : vector<8x384xf32>
    %6 = arith.truncf %5 : vector<8x384xf32> to vector<8x384xbf16>
    %c0_5 = arith.constant 0 : index
    %c0_6 = arith.constant 0 : index
    %7 = vector.load %arg2[%c0_5, %c0_6] : memref<384x64xbf16, #tpu.memory_space<vmem>>, vector<384x64xbf16>
    %cst = arith.constant dense<0.000000e+00> : vector<8x64xf32>
    %8 = tpu.matmul %6, %7, %cst {dimension_numbers = #tpu.dot_dimension_numbers<[1], [0], [0], [1], [0, 0, 1, 1], [], []>} : vector<8x384xbf16>, vector<384x64xbf16>, vector<8x64xf32> -> vector<8x64xf32>
    %c0_7 = arith.constant 0 : index
    %c0_8 = arith.constant 0 : index
    %9 = vector.load %arg3[%c0_7, %c0_8] : memref<1x64xf32, #tpu.memory_space<vmem>>, vector<1x64xf32>
    %10 = vector.broadcast %9 : vector<1x64xf32> to vector<8x64xf32>
    %11 = arith.addf %8, %10 : vector<8x64xf32>
    %12 = arith.truncf %11 : vector<8x64xf32> to vector<8x64xbf16>
    %cst_9 = arith.constant dense<0.000000e+00> : vector<8x384xf32>
    %13 = tpu.matmul %12, %2, %cst_9 {dimension_numbers = #tpu.dot_dimension_numbers<[1], [0], [0], [1], [0, 0, 1, 1], [], []>} : vector<8x64xbf16>, vector<64x384xbf16>, vector<8x384xf32> -> vector<8x384xf32>
    %c0_10 = arith.constant 0 : index
    %c0_11 = arith.constant 0 : index
    %14 = vector.load %arg7[%c0_10, %c0_11] : memref<1x384xf32, #tpu.memory_space<vmem>>, vector<1x384xf32>
    %15 = vector.broadcast %14 : vector<1x384xf32> to vector<8x384xf32>
    %16 = arith.addf %13, %15 : vector<8x384xf32>
    %c0_12 = arith.constant 0 : index
    %c0_13 = arith.constant 0 : index
    %17 = vector.load %arg8[%c0_12, %c0_13] : memref<1x128xf32, #tpu.memory_space<vmem>>, vector<1x128xf32>
    %c0_14 = arith.constant 0 : index
    %c0_15 = arith.constant 0 : index
    %18 = vector.load %arg4[%c0_14, %c0_15] : memref<64x128xf32, #tpu.memory_space<vmem>>, vector<64x128xf32>
    %19 = arith.truncf %18 : vector<64x128xf32> to vector<64x128xbf16>
    %cst_16 = arith.constant dense<0.000000e+00> : vector<64x384xf32>
    %20 = tpu.matmul %19, %1, %cst_16 {dimension_numbers = #tpu.dot_dimension_numbers<[1], [0], [0], [1], [0, 0, 1, 1], [], []>} : vector<64x128xbf16>, vector<128x384xbf16>, vector<64x384xf32> -> vector<64x384xf32>
    %cst_17 = arith.constant 0.000000e+00 : f32
    %21 = vector.broadcast %cst_17 : f32 to vector<8x128xf32>
    %22 = vector.extract_strided_slice %20 {offsets = [0, 0], sizes = [8, 384], strides = [1, 1]} : vector<64x384xf32> to vector<8x384xf32>
    %23 = arith.addf %22, %16 : vector<8x384xf32>
    %24 = arith.truncf %21 : vector<8x128xf32> to vector<8x128xbf16>
    %cst_18 = arith.constant dense<0.000000e+00> : vector<8x384xf32>
    %25 = tpu.matmul %24, %3, %cst_18 {dimension_numbers = #tpu.dot_dimension_numbers<[1], [0], [0], [1], [0, 0, 1, 1], [], []>} : vector<8x128xbf16>, vector<128x384xbf16>, vector<8x384xf32> -> vector<8x384xf32>
    %26 = vector.extract_strided_slice %23 {offsets = [0, 0], sizes = [8, 256], strides = [1, 1]} : vector<8x384xf32> to vector<8x256xf32>
    %27 = vector.extract_strided_slice %25 {offsets = [0, 0], sizes = [8, 256], strides = [1, 1]} : vector<8x384xf32> to vector<8x256xf32>
    %28 = arith.addf %26, %27 : vector<8x256xf32>
    %29 = arith.negf %28 : vector<8x256xf32>
    %30 = math.exp %29 : vector<8x256xf32>
    %cst_19 = arith.constant 1.000000e+00 : f32
    %31 = vector.broadcast %cst_19 : f32 to vector<8x256xf32>
    %32 = arith.addf %31, %30 : vector<8x256xf32>
    %33 = arith.divf %31, %32 : vector<8x256xf32>
    %34 = vector.extract_strided_slice %33 {offsets = [0, 0], sizes = [8, 128], strides = [1, 1]} : vector<8x256xf32> to vector<8x128xf32>
    %35 = vector.extract_strided_slice %33 {offsets = [0, 128], sizes = [8, 128], strides = [1, 1]} : vector<8x256xf32> to vector<8x128xf32>
    %36 = vector.extract_strided_slice %23 {offsets = [0, 256], sizes = [8, 128], strides = [1, 1]} : vector<8x384xf32> to vector<8x128xf32>
    %37 = vector.extract_strided_slice %25 {offsets = [0, 256], sizes = [8, 128], strides = [1, 1]} : vector<8x384xf32> to vector<8x128xf32>
    %38 = vector.broadcast %17 : vector<1x128xf32> to vector<8x128xf32>
    %39 = arith.addf %37, %38 : vector<8x128xf32>
    %40 = arith.mulf %34, %39 : vector<8x128xf32>
    %41 = arith.addf %36, %40 : vector<8x128xf32>
    %42 = math.tanh %41 : vector<8x128xf32>
    %43 = arith.subf %21, %42 : vector<8x128xf32>
    %44 = arith.mulf %35, %43 : vector<8x128xf32>
    %45 = arith.addf %42, %44 : vector<8x128xf32>
    %46 = vector.extract_strided_slice %20 {offsets = [8, 0], sizes = [8, 384], strides = [1, 1]} : vector<64x384xf32> to vector<8x384xf32>
    %47 = arith.addf %46, %16 : vector<8x384xf32>
    %48 = arith.truncf %45 : vector<8x128xf32> to vector<8x128xbf16>
    %cst_20 = arith.constant dense<0.000000e+00> : vector<8x384xf32>
    %49 = tpu.matmul %48, %3, %cst_20 {dimension_numbers = #tpu.dot_dimension_numbers<[1], [0], [0], [1], [0, 0, 1, 1], [], []>} : vector<8x128xbf16>, vector<128x384xbf16>, vector<8x384xf32> -> vector<8x384xf32>
    %50 = vector.extract_strided_slice %47 {offsets = [0, 0], sizes = [8, 256], strides = [1, 1]} : vector<8x384xf32> to vector<8x256xf32>
    %51 = vector.extract_strided_slice %49 {offsets = [0, 0], sizes = [8, 256], strides = [1, 1]} : vector<8x384xf32> to vector<8x256xf32>
    %52 = arith.addf %50, %51 : vector<8x256xf32>
    %53 = arith.negf %52 : vector<8x256xf32>
    %54 = math.exp %53 : vector<8x256xf32>
    %cst_21 = arith.constant 1.000000e+00 : f32
    %55 = vector.broadcast %cst_21 : f32 to vector<8x256xf32>
    %56 = arith.addf %55, %54 : vector<8x256xf32>
    %57 = arith.divf %55, %56 : vector<8x256xf32>
    %58 = vector.extract_strided_slice %57 {offsets = [0, 0], sizes = [8, 128], strides = [1, 1]} : vector<8x256xf32> to vector<8x128xf32>
    %59 = vector.extract_strided_slice %57 {offsets = [0, 128], sizes = [8, 128], strides = [1, 1]} : vector<8x256xf32> to vector<8x128xf32>
    %60 = vector.extract_strided_slice %47 {offsets = [0, 256], sizes = [8, 128], strides = [1, 1]} : vector<8x384xf32> to vector<8x128xf32>
    %61 = vector.extract_strided_slice %49 {offsets = [0, 256], sizes = [8, 128], strides = [1, 1]} : vector<8x384xf32> to vector<8x128xf32>
    %62 = vector.broadcast %17 : vector<1x128xf32> to vector<8x128xf32>
    %63 = arith.addf %61, %62 : vector<8x128xf32>
    %64 = arith.mulf %58, %63 : vector<8x128xf32>
    %65 = arith.addf %60, %64 : vector<8x128xf32>
    %66 = math.tanh %65 : vector<8x128xf32>
    %67 = arith.subf %45, %66 : vector<8x128xf32>
    %68 = arith.mulf %59, %67 : vector<8x128xf32>
    %69 = arith.addf %66, %68 : vector<8x128xf32>
    %70 = vector.extract_strided_slice %20 {offsets = [16, 0], sizes = [8, 384], strides = [1, 1]} : vector<64x384xf32> to vector<8x384xf32>
    %71 = arith.addf %70, %16 : vector<8x384xf32>
    %72 = arith.truncf %69 : vector<8x128xf32> to vector<8x128xbf16>
    %cst_22 = arith.constant dense<0.000000e+00> : vector<8x384xf32>
    %73 = tpu.matmul %72, %3, %cst_22 {dimension_numbers = #tpu.dot_dimension_numbers<[1], [0], [0], [1], [0, 0, 1, 1], [], []>} : vector<8x128xbf16>, vector<128x384xbf16>, vector<8x384xf32> -> vector<8x384xf32>
    %74 = vector.extract_strided_slice %71 {offsets = [0, 0], sizes = [8, 256], strides = [1, 1]} : vector<8x384xf32> to vector<8x256xf32>
    %75 = vector.extract_strided_slice %73 {offsets = [0, 0], sizes = [8, 256], strides = [1, 1]} : vector<8x384xf32> to vector<8x256xf32>
    %76 = arith.addf %74, %75 : vector<8x256xf32>
    %77 = arith.negf %76 : vector<8x256xf32>
    %78 = math.exp %77 : vector<8x256xf32>
    %cst_23 = arith.constant 1.000000e+00 : f32
    %79 = vector.broadcast %cst_23 : f32 to vector<8x256xf32>
    %80 = arith.addf %79, %78 : vector<8x256xf32>
    %81 = arith.divf %79, %80 : vector<8x256xf32>
    %82 = vector.extract_strided_slice %81 {offsets = [0, 0], sizes = [8, 128], strides = [1, 1]} : vector<8x256xf32> to vector<8x128xf32>
    %83 = vector.extract_strided_slice %81 {offsets = [0, 128], sizes = [8, 128], strides = [1, 1]} : vector<8x256xf32> to vector<8x128xf32>
    %84 = vector.extract_strided_slice %71 {offsets = [0, 256], sizes = [8, 128], strides = [1, 1]} : vector<8x384xf32> to vector<8x128xf32>
    %85 = vector.extract_strided_slice %73 {offsets = [0, 256], sizes = [8, 128], strides = [1, 1]} : vector<8x384xf32> to vector<8x128xf32>
    %86 = vector.broadcast %17 : vector<1x128xf32> to vector<8x128xf32>
    %87 = arith.addf %85, %86 : vector<8x128xf32>
    %88 = arith.mulf %82, %87 : vector<8x128xf32>
    %89 = arith.addf %84, %88 : vector<8x128xf32>
    %90 = math.tanh %89 : vector<8x128xf32>
    %91 = arith.subf %69, %90 : vector<8x128xf32>
    %92 = arith.mulf %83, %91 : vector<8x128xf32>
    %93 = arith.addf %90, %92 : vector<8x128xf32>
    %94 = vector.extract_strided_slice %20 {offsets = [24, 0], sizes = [8, 384], strides = [1, 1]} : vector<64x384xf32> to vector<8x384xf32>
    %95 = arith.addf %94, %16 : vector<8x384xf32>
    %96 = arith.truncf %93 : vector<8x128xf32> to vector<8x128xbf16>
    %cst_24 = arith.constant dense<0.000000e+00> : vector<8x384xf32>
    %97 = tpu.matmul %96, %3, %cst_24 {dimension_numbers = #tpu.dot_dimension_numbers<[1], [0], [0], [1], [0, 0, 1, 1], [], []>} : vector<8x128xbf16>, vector<128x384xbf16>, vector<8x384xf32> -> vector<8x384xf32>
    %98 = vector.extract_strided_slice %95 {offsets = [0, 0], sizes = [8, 256], strides = [1, 1]} : vector<8x384xf32> to vector<8x256xf32>
    %99 = vector.extract_strided_slice %97 {offsets = [0, 0], sizes = [8, 256], strides = [1, 1]} : vector<8x384xf32> to vector<8x256xf32>
    %100 = arith.addf %98, %99 : vector<8x256xf32>
    %101 = arith.negf %100 : vector<8x256xf32>
    %102 = math.exp %101 : vector<8x256xf32>
    %cst_25 = arith.constant 1.000000e+00 : f32
    %103 = vector.broadcast %cst_25 : f32 to vector<8x256xf32>
    %104 = arith.addf %103, %102 : vector<8x256xf32>
    %105 = arith.divf %103, %104 : vector<8x256xf32>
    %106 = vector.extract_strided_slice %105 {offsets = [0, 0], sizes = [8, 128], strides = [1, 1]} : vector<8x256xf32> to vector<8x128xf32>
    %107 = vector.extract_strided_slice %105 {offsets = [0, 128], sizes = [8, 128], strides = [1, 1]} : vector<8x256xf32> to vector<8x128xf32>
    %108 = vector.extract_strided_slice %95 {offsets = [0, 256], sizes = [8, 128], strides = [1, 1]} : vector<8x384xf32> to vector<8x128xf32>
    %109 = vector.extract_strided_slice %97 {offsets = [0, 256], sizes = [8, 128], strides = [1, 1]} : vector<8x384xf32> to vector<8x128xf32>
    %110 = vector.broadcast %17 : vector<1x128xf32> to vector<8x128xf32>
    %111 = arith.addf %109, %110 : vector<8x128xf32>
    %112 = arith.mulf %106, %111 : vector<8x128xf32>
    %113 = arith.addf %108, %112 : vector<8x128xf32>
    %114 = math.tanh %113 : vector<8x128xf32>
    %115 = arith.subf %93, %114 : vector<8x128xf32>
    %116 = arith.mulf %107, %115 : vector<8x128xf32>
    %117 = arith.addf %114, %116 : vector<8x128xf32>
    %118 = vector.extract_strided_slice %20 {offsets = [32, 0], sizes = [8, 384], strides = [1, 1]} : vector<64x384xf32> to vector<8x384xf32>
    %119 = arith.addf %118, %16 : vector<8x384xf32>
    %120 = arith.truncf %117 : vector<8x128xf32> to vector<8x128xbf16>
    %cst_26 = arith.constant dense<0.000000e+00> : vector<8x384xf32>
    %121 = tpu.matmul %120, %3, %cst_26 {dimension_numbers = #tpu.dot_dimension_numbers<[1], [0], [0], [1], [0, 0, 1, 1], [], []>} : vector<8x128xbf16>, vector<128x384xbf16>, vector<8x384xf32> -> vector<8x384xf32>
    %122 = vector.extract_strided_slice %119 {offsets = [0, 0], sizes = [8, 256], strides = [1, 1]} : vector<8x384xf32> to vector<8x256xf32>
    %123 = vector.extract_strided_slice %121 {offsets = [0, 0], sizes = [8, 256], strides = [1, 1]} : vector<8x384xf32> to vector<8x256xf32>
    %124 = arith.addf %122, %123 : vector<8x256xf32>
    %125 = arith.negf %124 : vector<8x256xf32>
    %126 = math.exp %125 : vector<8x256xf32>
    %cst_27 = arith.constant 1.000000e+00 : f32
    %127 = vector.broadcast %cst_27 : f32 to vector<8x256xf32>
    %128 = arith.addf %127, %126 : vector<8x256xf32>
    %129 = arith.divf %127, %128 : vector<8x256xf32>
    %130 = vector.extract_strided_slice %129 {offsets = [0, 0], sizes = [8, 128], strides = [1, 1]} : vector<8x256xf32> to vector<8x128xf32>
    %131 = vector.extract_strided_slice %129 {offsets = [0, 128], sizes = [8, 128], strides = [1, 1]} : vector<8x256xf32> to vector<8x128xf32>
    %132 = vector.extract_strided_slice %119 {offsets = [0, 256], sizes = [8, 128], strides = [1, 1]} : vector<8x384xf32> to vector<8x128xf32>
    %133 = vector.extract_strided_slice %121 {offsets = [0, 256], sizes = [8, 128], strides = [1, 1]} : vector<8x384xf32> to vector<8x128xf32>
    %134 = vector.broadcast %17 : vector<1x128xf32> to vector<8x128xf32>
    %135 = arith.addf %133, %134 : vector<8x128xf32>
    %136 = arith.mulf %130, %135 : vector<8x128xf32>
    %137 = arith.addf %132, %136 : vector<8x128xf32>
    %138 = math.tanh %137 : vector<8x128xf32>
    %139 = arith.subf %117, %138 : vector<8x128xf32>
    %140 = arith.mulf %131, %139 : vector<8x128xf32>
    %141 = arith.addf %138, %140 : vector<8x128xf32>
    %142 = vector.extract_strided_slice %20 {offsets = [40, 0], sizes = [8, 384], strides = [1, 1]} : vector<64x384xf32> to vector<8x384xf32>
    %143 = arith.addf %142, %16 : vector<8x384xf32>
    %144 = arith.truncf %141 : vector<8x128xf32> to vector<8x128xbf16>
    %cst_28 = arith.constant dense<0.000000e+00> : vector<8x384xf32>
    %145 = tpu.matmul %144, %3, %cst_28 {dimension_numbers = #tpu.dot_dimension_numbers<[1], [0], [0], [1], [0, 0, 1, 1], [], []>} : vector<8x128xbf16>, vector<128x384xbf16>, vector<8x384xf32> -> vector<8x384xf32>
    %146 = vector.extract_strided_slice %143 {offsets = [0, 0], sizes = [8, 256], strides = [1, 1]} : vector<8x384xf32> to vector<8x256xf32>
    %147 = vector.extract_strided_slice %145 {offsets = [0, 0], sizes = [8, 256], strides = [1, 1]} : vector<8x384xf32> to vector<8x256xf32>
    %148 = arith.addf %146, %147 : vector<8x256xf32>
    %149 = arith.negf %148 : vector<8x256xf32>
    %150 = math.exp %149 : vector<8x256xf32>
    %cst_29 = arith.constant 1.000000e+00 : f32
    %151 = vector.broadcast %cst_29 : f32 to vector<8x256xf32>
    %152 = arith.addf %151, %150 : vector<8x256xf32>
    %153 = arith.divf %151, %152 : vector<8x256xf32>
    %154 = vector.extract_strided_slice %153 {offsets = [0, 0], sizes = [8, 128], strides = [1, 1]} : vector<8x256xf32> to vector<8x128xf32>
    %155 = vector.extract_strided_slice %153 {offsets = [0, 128], sizes = [8, 128], strides = [1, 1]} : vector<8x256xf32> to vector<8x128xf32>
    %156 = vector.extract_strided_slice %143 {offsets = [0, 256], sizes = [8, 128], strides = [1, 1]} : vector<8x384xf32> to vector<8x128xf32>
    %157 = vector.extract_strided_slice %145 {offsets = [0, 256], sizes = [8, 128], strides = [1, 1]} : vector<8x384xf32> to vector<8x128xf32>
    %158 = vector.broadcast %17 : vector<1x128xf32> to vector<8x128xf32>
    %159 = arith.addf %157, %158 : vector<8x128xf32>
    %160 = arith.mulf %154, %159 : vector<8x128xf32>
    %161 = arith.addf %156, %160 : vector<8x128xf32>
    %162 = math.tanh %161 : vector<8x128xf32>
    %163 = arith.subf %141, %162 : vector<8x128xf32>
    %164 = arith.mulf %155, %163 : vector<8x128xf32>
    %165 = arith.addf %162, %164 : vector<8x128xf32>
    %166 = vector.extract_strided_slice %20 {offsets = [48, 0], sizes = [8, 384], strides = [1, 1]} : vector<64x384xf32> to vector<8x384xf32>
    %167 = arith.addf %166, %16 : vector<8x384xf32>
    %168 = arith.truncf %165 : vector<8x128xf32> to vector<8x128xbf16>
    %cst_30 = arith.constant dense<0.000000e+00> : vector<8x384xf32>
    %169 = tpu.matmul %168, %3, %cst_30 {dimension_numbers = #tpu.dot_dimension_numbers<[1], [0], [0], [1], [0, 0, 1, 1], [], []>} : vector<8x128xbf16>, vector<128x384xbf16>, vector<8x384xf32> -> vector<8x384xf32>
    %170 = vector.extract_strided_slice %167 {offsets = [0, 0], sizes = [8, 256], strides = [1, 1]} : vector<8x384xf32> to vector<8x256xf32>
    %171 = vector.extract_strided_slice %169 {offsets = [0, 0], sizes = [8, 256], strides = [1, 1]} : vector<8x384xf32> to vector<8x256xf32>
    %172 = arith.addf %170, %171 : vector<8x256xf32>
    %173 = arith.negf %172 : vector<8x256xf32>
    %174 = math.exp %173 : vector<8x256xf32>
    %cst_31 = arith.constant 1.000000e+00 : f32
    %175 = vector.broadcast %cst_31 : f32 to vector<8x256xf32>
    %176 = arith.addf %175, %174 : vector<8x256xf32>
    %177 = arith.divf %175, %176 : vector<8x256xf32>
    %178 = vector.extract_strided_slice %177 {offsets = [0, 0], sizes = [8, 128], strides = [1, 1]} : vector<8x256xf32> to vector<8x128xf32>
    %179 = vector.extract_strided_slice %177 {offsets = [0, 128], sizes = [8, 128], strides = [1, 1]} : vector<8x256xf32> to vector<8x128xf32>
    %180 = vector.extract_strided_slice %167 {offsets = [0, 256], sizes = [8, 128], strides = [1, 1]} : vector<8x384xf32> to vector<8x128xf32>
    %181 = vector.extract_strided_slice %169 {offsets = [0, 256], sizes = [8, 128], strides = [1, 1]} : vector<8x384xf32> to vector<8x128xf32>
    %182 = vector.broadcast %17 : vector<1x128xf32> to vector<8x128xf32>
    %183 = arith.addf %181, %182 : vector<8x128xf32>
    %184 = arith.mulf %178, %183 : vector<8x128xf32>
    %185 = arith.addf %180, %184 : vector<8x128xf32>
    %186 = math.tanh %185 : vector<8x128xf32>
    %187 = arith.subf %165, %186 : vector<8x128xf32>
    %188 = arith.mulf %179, %187 : vector<8x128xf32>
    %189 = arith.addf %186, %188 : vector<8x128xf32>
    %190 = vector.extract_strided_slice %20 {offsets = [56, 0], sizes = [8, 384], strides = [1, 1]} : vector<64x384xf32> to vector<8x384xf32>
    %191 = arith.addf %190, %16 : vector<8x384xf32>
    %192 = arith.truncf %189 : vector<8x128xf32> to vector<8x128xbf16>
    %cst_32 = arith.constant dense<0.000000e+00> : vector<8x384xf32>
    %193 = tpu.matmul %192, %3, %cst_32 {dimension_numbers = #tpu.dot_dimension_numbers<[1], [0], [0], [1], [0, 0, 1, 1], [], []>} : vector<8x128xbf16>, vector<128x384xbf16>, vector<8x384xf32> -> vector<8x384xf32>
    %194 = vector.extract_strided_slice %191 {offsets = [0, 0], sizes = [8, 256], strides = [1, 1]} : vector<8x384xf32> to vector<8x256xf32>
    %195 = vector.extract_strided_slice %193 {offsets = [0, 0], sizes = [8, 256], strides = [1, 1]} : vector<8x384xf32> to vector<8x256xf32>
    %196 = arith.addf %194, %195 : vector<8x256xf32>
    %197 = arith.negf %196 : vector<8x256xf32>
    %198 = math.exp %197 : vector<8x256xf32>
    %cst_33 = arith.constant 1.000000e+00 : f32
    %199 = vector.broadcast %cst_33 : f32 to vector<8x256xf32>
    %200 = arith.addf %199, %198 : vector<8x256xf32>
    %201 = arith.divf %199, %200 : vector<8x256xf32>
    %202 = vector.extract_strided_slice %201 {offsets = [0, 0], sizes = [8, 128], strides = [1, 1]} : vector<8x256xf32> to vector<8x128xf32>
    %203 = vector.extract_strided_slice %201 {offsets = [0, 128], sizes = [8, 128], strides = [1, 1]} : vector<8x256xf32> to vector<8x128xf32>
    %204 = vector.extract_strided_slice %191 {offsets = [0, 256], sizes = [8, 128], strides = [1, 1]} : vector<8x384xf32> to vector<8x128xf32>
    %205 = vector.extract_strided_slice %193 {offsets = [0, 256], sizes = [8, 128], strides = [1, 1]} : vector<8x384xf32> to vector<8x128xf32>
    %206 = vector.broadcast %17 : vector<1x128xf32> to vector<8x128xf32>
    %207 = arith.addf %205, %206 : vector<8x128xf32>
    %208 = arith.mulf %202, %207 : vector<8x128xf32>
    %209 = arith.addf %204, %208 : vector<8x128xf32>
    %210 = math.tanh %209 : vector<8x128xf32>
    %211 = arith.subf %189, %210 : vector<8x128xf32>
    %212 = arith.mulf %203, %211 : vector<8x128xf32>
    %213 = arith.addf %210, %212 : vector<8x128xf32>
    %214 = math.tanh %213 : vector<8x128xf32>
    %c0_34 = arith.constant 0 : index
    %c0_35 = arith.constant 0 : index
    %215 = vector.load %arg10[%c0_34, %c0_35] : memref<128x2xf32, #tpu.memory_space<vmem>>, vector<128x2xf32>
    %cst_36 = arith.constant dense<0.000000e+00> : vector<8x2xf32>
    %216 = tpu.matmul %214, %215, %cst_36 {dimension_numbers = #tpu.dot_dimension_numbers<[1], [0], [0], [1], [0, 0, 1, 1], [], []>} : vector<8x128xf32>, vector<128x2xf32>, vector<8x2xf32> -> vector<8x2xf32>
    %c0_37 = arith.constant 0 : index
    %c0_38 = arith.constant 0 : index
    %217 = vector.load %arg9[%c0_37, %c0_38] : memref<8x3xf32, #tpu.memory_space<vmem>>, vector<8x3xf32>
    %218 = math.tanh %217 : vector<8x3xf32>
    %c0_39 = arith.constant 0 : index
    %c0_40 = arith.constant 0 : index
    %219 = vector.load %arg11[%c0_39, %c0_40] : memref<3x2xf32, #tpu.memory_space<vmem>>, vector<3x2xf32>
    %cst_41 = arith.constant dense<0.000000e+00> : vector<8x2xf32>
    %220 = tpu.matmul %218, %219, %cst_41 {dimension_numbers = #tpu.dot_dimension_numbers<[1], [0], [0], [1], [0, 0, 1, 1], [], []>} : vector<8x3xf32>, vector<3x2xf32>, vector<8x2xf32> -> vector<8x2xf32>
    %221 = arith.addf %216, %220 : vector<8x2xf32>
    %c0_42 = arith.constant 0 : index
    %c0_43 = arith.constant 0 : index
    %222 = vector.load %arg12[%c0_42, %c0_43] : memref<1x2xf32, #tpu.memory_space<vmem>>, vector<1x2xf32>
    %223 = vector.broadcast %222 : vector<1x2xf32> to vector<8x2xf32>
    %224 = arith.addf %221, %223 : vector<8x2xf32>
    %c0_44 = arith.constant 0 : index
    %c0_45 = arith.constant 0 : index
    %225 = vector.load %arg13[%c0_44, %c0_45] : memref<8x2xf32, #tpu.memory_space<vmem>>, vector<8x2xf32>
    tpu.vector_store %arg13[%c0_44, %c0_45], %224 {strides = array<i32>} : memref<8x2xf32, #tpu.memory_space<vmem>>, vector<8x2xf32>,
    return
  }
  func.func @transform_0(%arg0: i32) -> (i32, i32) {
    %c0_i32 = arith.constant 0 : i32
    %c0_i32_0 = arith.constant 0 : i32
    return %arg0, %c0_i32 : i32, i32
  }
  func.func @transform_1(%arg0: i32) -> (i32, i32) {
    %c0_i32 = arith.constant 0 : i32
    %c0_i32_0 = arith.constant 0 : i32
    %c0_i32_1 = arith.constant 0 : i32
    return %c0_i32, %c0_i32_0 : i32, i32
  }
  func.func @transform_2(%arg0: i32) -> (i32, i32) {
    %c0_i32 = arith.constant 0 : i32
    %c0_i32_0 = arith.constant 0 : i32
    %c0_i32_1 = arith.constant 0 : i32
    return %c0_i32, %c0_i32_0 : i32, i32
  }
  func.func @transform_3(%arg0: i32) -> (i32, i32) {
    %c0_i32 = arith.constant 0 : i32
    %c0_i32_0 = arith.constant 0 : i32
    return %arg0, %c0_i32 : i32, i32
  }
  func.func @transform_4(%arg0: i32) -> (i32, i32) {
    %c0_i32 = arith.constant 0 : i32
    %c0_i32_0 = arith.constant 0 : i32
    %c0_i32_1 = arith.constant 0 : i32
    return %c0_i32, %c0_i32_0 : i32, i32
  }
  func.func @transform_5(%arg0: i32) -> (i32, i32) {
    %c0_i32 = arith.constant 0 : i32
    %c0_i32_0 = arith.constant 0 : i32
    %c0_i32_1 = arith.constant 0 : i32
    return %c0_i32, %c0_i32_0 : i32, i32
  }
  func.func @transform_6(%arg0: i32) -> (i32, i32) {
    %c0_i32 = arith.constant 0 : i32
    %c0_i32_0 = arith.constant 0 : i32
    %c0_i32_1 = arith.constant 0 : i32
    return %c0_i32, %c0_i32_0 : i32, i32
  }
  func.func @transform_7(%arg0: i32) -> (i32, i32) {
    %c0_i32 = arith.constant 0 : i32
    %c0_i32_0 = arith.constant 0 : i32
    %c0_i32_1 = arith.constant 0 : i32
    return %c0_i32, %c0_i32_0 : i32, i32
  }
  func.func @transform_8(%arg0: i32) -> (i32, i32) {
    %c0_i32 = arith.constant 0 : i32
    %c0_i32_0 = arith.constant 0 : i32
    return %arg0, %c0_i32 : i32, i32
  }
  func.func @transform_9(%arg0: i32) -> (i32, i32) {
    %c0_i32 = arith.constant 0 : i32
    %c0_i32_0 = arith.constant 0 : i32
    %c0_i32_1 = arith.constant 0 : i32
    return %c0_i32, %c0_i32_0 : i32, i32
  }
  func.func @transform_10(%arg0: i32) -> (i32, i32) {
    %c0_i32 = arith.constant 0 : i32
    %c0_i32_0 = arith.constant 0 : i32
    %c0_i32_1 = arith.constant 0 : i32
    return %c0_i32, %c0_i32_0 : i32, i32
  }
  func.func @transform_11(%arg0: i32) -> (i32, i32) {
    %c0_i32 = arith.constant 0 : i32
    %c0_i32_0 = arith.constant 0 : i32
    %c0_i32_1 = arith.constant 0 : i32
    return %c0_i32, %c0_i32_0 : i32, i32
  }
  func.func @transform_12(%arg0: i32) -> (i32, i32) {
    %c0_i32 = arith.constant 0 : i32
    %c0_i32_0 = arith.constant 0 : i32
    return %arg0, %c0_i32 : i32, i32
  }
}

</mosaic_0001>

<llo_original>
// kernel: rnn_forward.1
$region0: #{rnn_forward.1}
  #allocation0 [shape = 'u32[]', space=smem, size = 0x4, offset = 0x4, fixed_abs, tag = 'smem constant byte address 0x4 - core index']
  #allocation1 [shape = 'u32[144,128]{1,0:T(1,128)}', space=vmem, size = 0x12000, scoped, tag = 'internal scratch']
  %s0 = inlined_call_operand.vmem [shape: f32[16,384], index: 0, kind: input, shape index: {}]
  %s1 = inlined_call_operand.vmem [shape: bf16[384,64], index: 1, kind: input, shape index: {}]
  %s2 = inlined_call_operand.vmem [shape: f32[1,64], index: 2, kind: input, shape index: {}]
  %s3 = inlined_call_operand.vmem [shape: f32[128,128], index: 3, kind: input, shape index: {}]
  %s4 = inlined_call_operand.vmem [shape: bf16[192,384], index: 4, kind: input, shape index: {}]
  %s5 = inlined_call_operand.vmem [shape: bf16[128,384], index: 5, kind: input, shape index: {}]
  %s6 = inlined_call_operand.vmem [shape: f32[1,384], index: 6, kind: input, shape index: {}]
  %s7 = inlined_call_operand.vmem [shape: f32[1,128], index: 7, kind: input, shape index: {}]
  %s8 = inlined_call_operand.vmem [shape: f32[16,3], index: 8, kind: input, shape index: {}]
  %s9 = inlined_call_operand.vmem [shape: f32[128,2], index: 9, kind: input, shape index: {}]
  %s10 = inlined_call_operand.vmem [shape: f32[3,2], index: 10, kind: input, shape index: {}]
  %s11 = inlined_call_operand.vmem [shape: f32[1,2], index: 11, kind: input, shape index: {}]
  %s12 = inlined_call_operand.vmem [shape: f32[16,2], index: 12, kind: output, shape index: {}]
  %s13 = sld [smem:[#allocation0]]
  $region81: #{rnn_forward.1} parent=0
    _
  %s15 = ssub.s32 1, %s13
  %s16 = scalar_select 0, %s15, %s13
  loop: start=0, step=1, limit=4
  $region2: #{rnn_forward.1} parent=0 // loop_pre_header
    _
  $region3: #{rnn_forward.1} parent=0 // loop_header
    %s18 = sphi 0, %s22
    %p19 = scmp.ge.s32.totalorder %s18, 4
    %s28 = sphi 0, %s30
    %s31 = sphi 0, %s28
    %s32 = sphi 0, %s31
    %s48 = sphi 0, %s32
    %s52 = sphi 0, %s52
    %s54 = sphi 0, %s52
    %s55 = sphi 0, %s54
    %s69 = sphi 0, %s55
    %s73 = sphi 0, %s73
    %s75 = sphi 0, %s73
    %s76 = sphi 0, %s75
    %s90 = sphi 0, %s76
    %s96 = sphi 0, %s98
    %s99 = sphi 0, %s96
    %s100 = sphi 0, %s99
    %s116 = sphi 0, %s100
    %s120 = sphi 0, %s120
    %s122 = sphi 0, %s120
    %s123 = sphi 0, %s122
    %s137 = sphi 0, %s123
    %s141 = sphi 0, %s141
    %s143 = sphi 0, %s141
    %s144 = sphi 0, %s143
    %s158 = sphi 0, %s144
    %s162 = sphi 0, %s162
    %s164 = sphi 0, %s162
    %s165 = sphi 0, %s164
    %s179 = sphi 0, %s165
    %s183 = sphi 0, %s183
    %s185 = sphi 0, %s183
    %s186 = sphi 0, %s185
    %s200 = sphi 0, %s186
    %s206 = sphi 0, %s208
    %s209 = sphi 0, %s206
    %s210 = sphi 0, %s209
    %s226 = sphi 0, %s210
    %s230 = sphi 0, %s230
    %s232 = sphi 0, %s230
    %s233 = sphi 0, %s232
    %s247 = sphi 0, %s233
    %s251 = sphi 0, %s251
    %s253 = sphi 0, %s251
    %s254 = sphi 0, %s253
    %s268 = sphi 0, %s254
    %s272 = sphi 0, %s272
    %s274 = sphi 0, %s272
    %s275 = sphi 0, %s274
    %s289 = sphi 0, %s275
    %s295 = sphi 0, %s297
    %s298 = sphi 0, %s295
    %s299 = sphi 0, %s298
    %s315 = sphi 0, %s299
  $region4: #{rnn_forward.1} parent=0 // loop_header_branch
    %21 = sbr.rel (%p19) target = $region8
  $region5: #{rnn_forward.1} parent=0 // loop_body
    %s23 = ssub.s32 %s18, 1
    %s24 = ssub.s32 %s18, 2
    %s25 = sadd.s32 %s18, 1
    %s26 = ssub.s32 %s18, %s25
    %p27 = scmp.eq.s32.totalorder %s26, 0
    %s29 = sadd.s32 %s28, 1
    %s30 = scalar_select %p27, %s28, %s29
    %p33 = pneg %p27
    %p34 = scmp.eq.s32.totalorder %s18, 1
    %p35 = por %p33, %p34
    %p36 = scmp.ne.s32.totalorder %s28, %s31
    %p37 = scmp.eq.s32.totalorder %s18, 0
    %p38 = por %p36, %p37
    %p39 = scmp.ne.s32.totalorder %s28, %s31
    %p40 = scmp.eq.s32.totalorder %s23, 1
    %p41 = por %p39, %p40
    %p42 = scmp.ne.s32.totalorder %s31, %s32
    %p43 = scmp.eq.s32.totalorder %s23, 0
    %p44 = por %p42, %p43
    %p45 = scmp.ne.s32.totalorder %s31, %s32
    %p46 = scmp.eq.s32.totalorder %s24, 1
    %p47 = por %p45, %p46
    %p49 = scmp.ne.s32.totalorder %s32, %s48
    %p50 = scmp.eq.s32.totalorder %s24, 0
    %p51 = por %p49, %p50
    %s53 = sadd.s32 %s52, 1
    %p56 = scmp.eq.s32.totalorder %s18, 1
    %p57 = scmp.ne.s32.totalorder %s52, %s54
    %p58 = scmp.eq.s32.totalorder %s18, 0
    %p59 = por %p57, %p58
    %p60 = scmp.ne.s32.totalorder %s52, %s54
    %p61 = scmp.eq.s32.totalorder %s23, 1
    %p62 = por %p60, %p61
    %p63 = scmp.ne.s32.totalorder %s54, %s55
    %p64 = scmp.eq.s32.totalorder %s23, 0
    %p65 = por %p63, %p64
    %p66 = scmp.ne.s32.totalorder %s54, %s55
    %p67 = scmp.eq.s32.totalorder %s24, 1
    %p68 = por %p66, %p67
    %p70 = scmp.ne.s32.totalorder %s55, %s69
    %p71 = scmp.eq.s32.totalorder %s24, 0
    %p72 = por %p70, %p71
    %s74 = sadd.s32 %s73, 1
    %p77 = scmp.eq.s32.totalorder %s18, 1
    %p78 = scmp.ne.s32.totalorder %s73, %s75
    %p79 = scmp.eq.s32.totalorder %s18, 0
    %p80 = por %p78, %p79
    %p81 = scmp.ne.s32.totalorder %s73, %s75
    %p82 = scmp.eq.s32.totalorder %s23, 1
    %p83 = por %p81, %p82
    %p84 = scmp.ne.s32.totalorder %s75, %s76
    %p85 = scmp.eq.s32.totalorder %s23, 0
    %p86 = por %p84, %p85
    %p87 = scmp.ne.s32.totalorder %s75, %s76
    %p88 = scmp.eq.s32.totalorder %s24, 1
    %p89 = por %p87, %p88
    %p91 = scmp.ne.s32.totalorder %s76, %s90
    %p92 = scmp.eq.s32.totalorder %s24, 0
    %p93 = por %p91, %p92
    %s94 = ssub.s32 %s18, %s25
    %p95 = scmp.eq.s32.totalorder %s94, 0
    %s97 = sadd.s32 %s96, 1
    %s98 = scalar_select %p95, %s96, %s97
    %p101 = pneg %p95
    %p102 = scmp.eq.s32.totalorder %s18, 1
    %p103 = por %p101, %p102
    %p104 = scmp.ne.s32.totalorder %s96, %s99
    %p105 = scmp.eq.s32.totalorder %s18, 0
    %p106 = por %p104, %p105
    %p107 = scmp.ne.s32.totalorder %s96, %s99
    %p108 = scmp.eq.s32.totalorder %s23, 1
    %p109 = por %p107, %p108
    %p110 = scmp.ne.s32.totalorder %s99, %s100
    %p111 = scmp.eq.s32.totalorder %s23, 0
    %p112 = por %p110, %p111
    %p113 = scmp.ne.s32.totalorder %s99, %s100
    %p114 = scmp.eq.s32.totalorder %s24, 1
    %p115 = por %p113, %p114
    %p117 = scmp.ne.s32.totalorder %s100, %s116
    %p118 = scmp.eq.s32.totalorder %s24, 0
    %p119 = por %p117, %p118
    %s121 = sadd.s32 %s120, 1
    %p124 = scmp.eq.s32.totalorder %s18, 1
    %p125 = scmp.ne.s32.totalorder %s120, %s122
    %p126 = scmp.eq.s32.totalorder %s18, 0
    %p127 = por %p125, %p126
    %p128 = scmp.ne.s32.totalorder %s120, %s122
    %p129 = scmp.eq.s32.totalorder %s23, 1
    %p130 = por %p128, %p129
    %p131 = scmp.ne.s32.totalorder %s122, %s123
    %p132 = scmp.eq.s32.totalorder %s23, 0
    %p133 = por %p131, %p132
    %p134 = scmp.ne.s32.totalorder %s122, %s123
    %p135 = scmp.eq.s32.totalorder %s24, 1
    %p136 = por %p134, %p135
    %p138 = scmp.ne.s32.totalorder %s123, %s137
    %p139 = scmp.eq.s32.totalorder %s24, 0
    %p140 = por %p138, %p139
    %s142 = sadd.s32 %s141, 1
    %p145 = scmp.eq.s32.totalorder %s18, 1
    %p146 = scmp.ne.s32.totalorder %s141, %s143
    %p147 = scmp.eq.s32.totalorder %s18, 0
    %p148 = por %p146, %p147
    %p149 = scmp.ne.s32.totalorder %s141, %s143
    %p150 = scmp.eq.s32.totalorder %s23, 1
    %p151 = por %p149, %p150
    %p152 = scmp.ne.s32.totalorder %s143, %s144
    %p153 = scmp.eq.s32.totalorder %s23, 0
    %p154 = por %p152, %p153
    %p155 = scmp.ne.s32.totalorder %s143, %s144
    %p156 = scmp.eq.s32.totalorder %s24, 1
    %p157 = por %p155, %p156
    %p159 = scmp.ne.s32.totalorder %s144, %s158
    %p160 = scmp.eq.s32.totalorder %s24, 0
    %p161 = por %p159, %p160
    %s163 = sadd.s32 %s162, 1
    %p166 = scmp.eq.s32.totalorder %s18, 1
    %p167 = scmp.ne.s32.totalorder %s162, %s164
    %p168 = scmp.eq.s32.totalorder %s18, 0
    %p169 = por %p167, %p168
    %p170 = scmp.ne.s32.totalorder %s162, %s164
    %p171 = scmp.eq.s32.totalorder %s23, 1
    %p172 = por %p170, %p171
    %p173 = scmp.ne.s32.totalorder %s164, %s165
    %p174 = scmp.eq.s32.totalorder %s23, 0
    %p175 = por %p173, %p174
    %p176 = scmp.ne.s32.totalorder %s164, %s165
    %p177 = scmp.eq.s32.totalorder %s24, 1
    %p178 = por %p176, %p177
    %p180 = scmp.ne.s32.totalorder %s165, %s179
    %p181 = scmp.eq.s32.totalorder %s24, 0
    %p182 = por %p180, %p181
    %s184 = sadd.s32 %s183, 1
    %p187 = scmp.eq.s32.totalorder %s18, 1
    %p188 = scmp.ne.s32.totalorder %s183, %s185
    %p189 = scmp.eq.s32.totalorder %s18, 0
    %p190 = por %p188, %p189
    %p191 = scmp.ne.s32.totalorder %s183, %s185
    %p192 = scmp.eq.s32.totalorder %s23, 1
    %p193 = por %p191, %p192
    %p194 = scmp.ne.s32.totalorder %s185, %s186
    %p195 = scmp.eq.s32.totalorder %s23, 0
    %p196 = por %p194, %p195
    %p197 = scmp.ne.s32.totalorder %s185, %s186
    %p198 = scmp.eq.s32.totalorder %s24, 1
    %p199 = por %p197, %p198
    %p201 = scmp.ne.s32.totalorder %s186, %s200
    %p202 = scmp.eq.s32.totalorder %s24, 0
    %p203 = por %p201, %p202
    %s204 = ssub.s32 %s18, %s25
    %p205 = scmp.eq.s32.totalorder %s204, 0
    %s207 = sadd.s32 %s206, 1
    %s208 = scalar_select %p205, %s206, %s207
    %p211 = pneg %p205
    %p212 = scmp.eq.s32.totalorder %s18, 1
    %p213 = por %p211, %p212
    %p214 = scmp.ne.s32.totalorder %s206, %s209
    %p215 = scmp.eq.s32.totalorder %s18, 0
    %p216 = por %p214, %p215
    %p217 = scmp.ne.s32.totalorder %s206, %s209
    %p218 = scmp.eq.s32.totalorder %s23, 1
    %p219 = por %p217, %p218
    %p220 = scmp.ne.s32.totalorder %s209, %s210
    %p221 = scmp.eq.s32.totalorder %s23, 0
    %p222 = por %p220, %p221
    %p223 = scmp.ne.s32.totalorder %s209, %s210
    %p224 = scmp.eq.s32.totalorder %s24, 1
    %p225 = por %p223, %p224
    %p227 = scmp.ne.s32.totalorder %s210, %s226
    %p228 = scmp.eq.s32.totalorder %s24, 0
    %p229 = por %p227, %p228
    %s231 = sadd.s32 %s230, 1
    %p234 = scmp.eq.s32.totalorder %s18, 1
    %p235 = scmp.ne.s32.totalorder %s230, %s232
    %p236 = scmp.eq.s32.totalorder %s18, 0
    %p237 = por %p235, %p236
    %p238 = scmp.ne.s32.totalorder %s230, %s232
    %p239 = scmp.eq.s32.totalorder %s23, 1
    %p240 = por %p238, %p239
    %p241 = scmp.ne.s32.totalorder %s232, %s233
    %p242 = scmp.eq.s32.totalorder %s23, 0
    %p243 = por %p241, %p242
    %p244 = scmp.ne.s32.totalorder %s232, %s233
    %p245 = scmp.eq.s32.totalorder %s24, 1
    %p246 = por %p244, %p245
    %p248 = scmp.ne.s32.totalorder %s233, %s247
    %p249 = scmp.eq.s32.totalorder %s24, 0
    %p250 = por %p248, %p249
    %s252 = sadd.s32 %s251, 1
    %p255 = scmp.eq.s32.totalorder %s18, 1
    %p256 = scmp.ne.s32.totalorder %s251, %s253
    %p257 = scmp.eq.s32.totalorder %s18, 0
    %p258 = por %p256, %p257
    %p259 = scmp.ne.s32.totalorder %s251, %s253
    %p260 = scmp.eq.s32.totalorder %s23, 1
    %p261 = por %p259, %p260
    %p262 = scmp.ne.s32.totalorder %s253, %s254
    %p263 = scmp.eq.s32.totalorder %s23, 0
    %p264 = por %p262, %p263
    %p265 = scmp.ne.s32.totalorder %s253, %s254
    %p266 = scmp.eq.s32.totalorder %s24, 1
    %p267 = por %p265, %p266
    %p269 = scmp.ne.s32.totalorder %s254, %s268
    %p270 = scmp.eq.s32.totalorder %s24, 0
    %p271 = por %p269, %p270
    %s273 = sadd.s32 %s272, 1
    %p276 = scmp.eq.s32.totalorder %s18, 1
    %p277 = scmp.ne.s32.totalorder %s272, %s274
    %p278 = scmp.eq.s32.totalorder %s18, 0
    %p279 = por %p277, %p278
    %p280 = scmp.ne.s32.totalorder %s272, %s274
    %p281 = scmp.eq.s32.totalorder %s23, 1
    %p282 = por %p280, %p281
    %p283 = scmp.ne.s32.totalorder %s274, %s275
    %p284 = scmp.eq.s32.totalorder %s23, 0
    %p285 = por %p283, %p284
    %p286 = scmp.ne.s32.totalorder %s274, %s275
    %p287 = scmp.eq.s32.totalorder %s24, 1
    %p288 = por %p286, %p287
    %p290 = scmp.ne.s32.totalorder %s275, %s289
    %p291 = scmp.eq.s32.totalorder %s24, 0
    %p292 = por %p290, %p291
    %s293 = ssub.s32 %s18, %s25
    %p294 = scmp.eq.s32.totalorder %s293, 0
    %s296 = sadd.s32 %s295, 1
    %s297 = scalar_select %p294, %s295, %s296
    %p300 = pneg %p294
    %p301 = scmp.eq.s32.totalorder %s18, 1
    %p302 = por %p300, %p301
    %p303 = scmp.ne.s32.totalorder %s295, %s298
    %p304 = scmp.eq.s32.totalorder %s18, 0
    %p305 = por %p303, %p304
    %p306 = scmp.ne.s32.totalorder %s295, %s298
    %p307 = scmp.eq.s32.totalorder %s23, 1
    %p308 = por %p306, %p307
    %p309 = scmp.ne.s32.totalorder %s298, %s299
    %p310 = scmp.eq.s32.totalorder %s23, 0
    %p311 = por %p309, %p310
    %p312 = scmp.ne.s32.totalorder %s298, %s299
    %p313 = scmp.eq.s32.totalorder %s24, 1
    %p314 = por %p312, %p313
    %p316 = scmp.ne.s32.totalorder %s299, %s315
    %p317 = scmp.eq.s32.totalorder %s24, 0
    %p318 = por %p316, %p317
    %p319 = scmp.le.s32.totalorder 1, %s18
    %p320 = scmp.lt.s32.totalorder %s18, 3
    %p321 = pnand %p319, %p320
    %p322 = pneg %p321
    // Predicated region
    $region9: #{rnn_forward.1} parent=5 // pred_check
      _
    $region10: #{rnn_forward.1} parent=5 // pred_check_branch
      %324 = sbr.rel (%p321) target = $region12
    $region11: #{rnn_forward.1} parent=5 // pred_region
      %s325 = ssub.s32 %s18, 1
      // Predicated region
      $region13: #{rnn_forward.1} parent=11 // pred_check
        %p326 = pneg %p65
      $region14: #{rnn_forward.1} parent=11 // pred_check_branch
        %328 = sbr.rel (%p326) target = $region16
      $region15: #{rnn_forward.1} parent=11 // pred_region
        _
      $region16: #{rnn_forward.1} parent=11 // pred_fallthru
        _
      // Predicated region
      $region17: #{rnn_forward.1} parent=11 // pred_check
        %p329 = pneg %p86
      $region18: #{rnn_forward.1} parent=11 // pred_check_branch
        %331 = sbr.rel (%p329) target = $region20
      $region19: #{rnn_forward.1} parent=11 // pred_region
        _
      $region20: #{rnn_forward.1} parent=11 // pred_fallthru
        _
      // Predicated region
      $region21: #{rnn_forward.1} parent=11 // pred_check
        %p332 = pneg %p133
      $region22: #{rnn_forward.1} parent=11 // pred_check_branch
        %334 = sbr.rel (%p332) target = $region24
      $region23: #{rnn_forward.1} parent=11 // pred_region
        _
      $region24: #{rnn_forward.1} parent=11 // pred_fallthru
        _
      // Predicated region
      $region25: #{rnn_forward.1} parent=11 // pred_check
        %p335 = pneg %p154
      $region26: #{rnn_forward.1} parent=11 // pred_check_branch
        %337 = sbr.rel (%p335) target = $region28
      $region27: #{rnn_forward.1} parent=11 // pred_region
        _
      $region28: #{rnn_forward.1} parent=11 // pred_fallthru
        _
      // Predicated region
      $region29: #{rnn_forward.1} parent=11 // pred_check
        %p338 = pneg %p175
      $region30: #{rnn_forward.1} parent=11 // pred_check_branch
        %340 = sbr.rel (%p338) target = $region32
      $region31: #{rnn_forward.1} parent=11 // pred_region
        _
      $region32: #{rnn_forward.1} parent=11 // pred_fallthru
        _
      // Predicated region
      $region33: #{rnn_forward.1} parent=11 // pred_check
        %p341 = pneg %p196
      $region34: #{rnn_forward.1} parent=11 // pred_check_branch
        %343 = sbr.rel (%p341) target = $region36
      $region35: #{rnn_forward.1} parent=11 // pred_region
        _
      $region36: #{rnn_forward.1} parent=11 // pred_fallthru
        _
      // Predicated region
      $region37: #{rnn_forward.1} parent=11 // pred_check
        %p344 = pneg %p243
      $region38: #{rnn_forward.1} parent=11 // pred_check_branch
        %346 = sbr.rel (%p344) target = $region40
      $region39: #{rnn_forward.1} parent=11 // pred_region
        _
      $region40: #{rnn_forward.1} parent=11 // pred_fallthru
        _
      // Predicated region
      $region41: #{rnn_forward.1} parent=11 // pred_check
        %p347 = pneg %p264
      $region42: #{rnn_forward.1} parent=11 // pred_check_branch
        %349 = sbr.rel (%p347) target = $region44
      $region43: #{rnn_forward.1} parent=11 // pred_region
        _
      $region44: #{rnn_forward.1} parent=11 // pred_fallthru
        _
      // Predicated region
      $region45: #{rnn_forward.1} parent=11 // pred_check
        %p350 = pneg %p285
      $region46: #{rnn_forward.1} parent=11 // pred_check_branch
        %352 = sbr.rel (%p350) target = $region48
      $region47: #{rnn_forward.1} parent=11 // pred_region
        _
      $region48: #{rnn_forward.1} parent=11 // pred_fallthru
        _
    $region12: #{rnn_forward.1} parent=5 // pred_fallthru
      _
    %p353 = scmp.lt.s32.totalorder %s18, 2
    // Predicated region
    $region49: #{rnn_forward.1} parent=5 // pred_check
      %p354 = pneg %p353
    $region50: #{rnn_forward.1} parent=5 // pred_check_branch
      %356 = sbr.rel (%p354) target = $region52
    $region51: #{rnn_forward.1} parent=5 // pred_region
      // Predicated region
      $region53: #{rnn_forward.1} parent=51 // pred_check
        %p357 = pneg %p38
      $region54: #{rnn_forward.1} parent=51 // pred_check_branch
        %359 = sbr.rel (%p357) target = $region56
      $region55: #{rnn_forward.1} parent=51 // pred_region
        %p360 = scmp.lt.s32.totalorder %s18, 1
        %s361 = scalar_select %p360, %s18, 1
        %s362 = smul.addr %s361, 3
        %s363 = smul.addr %s362, 8
        %s364 = scalar_lea.vmem %s0, %s363
      $region56: #{rnn_forward.1} parent=51 // pred_fallthru
        _
      // Predicated region
      $region57: #{rnn_forward.1} parent=51 // pred_check
        %p365 = pneg %p106
      $region58: #{rnn_forward.1} parent=51 // pred_check_branch
        %367 = sbr.rel (%p365) target = $region60
      $region59: #{rnn_forward.1} parent=51 // pred_region
        %s368 = smul.u32 8, %s18
        %p369 = scmp.lt.s32.totalorder %s368, 15
        %s370 = scalar_select %p369, %s368, 15
        %s371 = smul.addr %s370, 8
        %s372 = scalar_lea.vmem %s3, %s371
        %s373 = smul.u32 8, %s18
      $region60: #{rnn_forward.1} parent=51 // pred_fallthru
        _
      // Predicated region
      $region61: #{rnn_forward.1} parent=51 // pred_check
        %p374 = pneg %p216
      $region62: #{rnn_forward.1} parent=51 // pred_check_branch
        %376 = sbr.rel (%p374) target = $region64
      $region63: #{rnn_forward.1} parent=51 // pred_region
        %p377 = scmp.lt.s32.totalorder %s18, 1
        %s378 = scalar_select %p377, %s18, 1
        %s379 = smul.addr %s378, 8
        %s380 = scalar_lea.vmem %s8, %s379
      $region64: #{rnn_forward.1} parent=51 // pred_fallthru
        _
    $region52: #{rnn_forward.1} parent=5 // pred_fallthru
      _
    %p381 = scmp.le.s32.totalorder 1, %s18
    %p382 = scmp.lt.s32.totalorder %s18, 3
    %p383 = pnand %p381, %p382
    %p384 = pneg %p383
    // Predicated region
    $region65: #{rnn_forward.1} parent=5 // pred_check
      _
    $region66: #{rnn_forward.1} parent=5 // pred_check_branch
      %386 = sbr.rel (%p383) target = $region68
    $region67: #{rnn_forward.1} parent=5 // pred_region
      %s387 = ssub.s32 %s18, 1
      %p388 = scmp.lt.s32.totalorder %s23, 1
      %s389 = scalar_select %p388, %s23, 1
      %s390 = smul.addr %s389, 3
      %s391 = smul.addr %s390, 8
      %s392 = scalar_lea.vmem %s0, %s391
      %p393 = pneg %p44
      %p394 = pneg %p41
      %p395 = pneg %p65
      %p396 = pneg %p62
      %p397 = pneg %p86
      %p398 = pneg %p83
      %s399 = smul.u32 8, %s23
      %p400 = scmp.lt.s32.totalorder %s399, 15
      %s401 = scalar_select %p400, %s399, 15
      %s402 = smul.addr %s401, 8
      %s403 = scalar_lea.vmem %s3, %s402
      %p404 = pneg %p112
      %p405 = pneg %p109
      %p406 = pneg %p133
      %p407 = pneg %p130
      %p408 = pneg %p154
      %p409 = pneg %p151
      %p410 = pneg %p175
      %p411 = pneg %p172
      %p412 = pneg %p196
      %p413 = pneg %p193
      %p414 = scmp.lt.s32.totalorder %s23, 1
      %s415 = scalar_select %p414, %s23, 1
      %s416 = smul.addr %s415, 8
      %s417 = scalar_lea.vmem %s8, %s416
      %p418 = pneg %p222
      %p419 = pneg %p219
      %p420 = pneg %p243
      %p421 = pneg %p240
      %p422 = pneg %p264
      %p423 = pneg %p261
      %p424 = pneg %p285
      %p425 = pneg %p282
      %p426 = pneg %p311
      %p427 = pneg %p308
      %p428 = scmp.lt.s32.totalorder %s23, 1
      %s429 = scalar_select %p428, %s23, 1
      %s430 = smul.addr %s429, 8
      %s431 = scalar_lea.vmem %s12, %s430
      %p432 = scmp.lt.s32.totalorder %s23, 1
      %s433 = scalar_select %p432, %s23, 1
      %s434 = smul.addr %s433, 3
      %s435 = smul.addr %s434, 8
      %s436 = scalar_lea.vmem %s0, %s435
      %s437 = smul.u32 8, %s23
      %p438 = scmp.lt.s32.totalorder %s437, 15
      %s439 = scalar_select %p438, %s437, 15
      %s440 = smul.addr %s439, 8
      %s441 = scalar_lea.vmem %s3, %s440
      %s442 = smul.u32 8, %s23
      %p443 = scmp.lt.s32.totalorder %s23, 1
      %s444 = scalar_select %p443, %s23, 1
      %s445 = smul.addr %s444, 8
      %s446 = scalar_lea.vmem %s8, %s445
      %p447 = scmp.lt.s32.totalorder %s23, 1
      %s448 = scalar_select %p447, %s23, 1
      %s449 = smul.addr %s448, 8
      %s450 = scalar_lea.vmem %s12, %s449
      %v452 = vld [vmem:[%s4] sm:$0xff]
      %v453 = vld [vmem:[%s4 + $0x8] sm:$0xf]
      %v454 = vld [vmem:[%s4 + $0xc] sm:$0xff]
      %v455 = vld [vmem:[%s4 + $0x14] sm:$0xf]
      %v456 = vld [vmem:[%s4 + $0x18] sm:$0xff]
      %v457 = vld [vmem:[%s4 + $0x20] sm:$0xf]
      %v458 = vld [vmem:[%s4 + $0x24] sm:$0xff]
      %v459 = vld [vmem:[%s4 + $0x2c] sm:$0xf]
      %v460 = vld [vmem:[%s4 + $0x30] sm:$0xff]
      %v461 = vld [vmem:[%s4 + $0x38] sm:$0xf]
      %v462 = vld [vmem:[%s4 + $0x3c] sm:$0xff]
      %v463 = vld [vmem:[%s4 + $0x44] sm:$0xf]
      %v464 = vld [vmem:[%s4 + $0x48] sm:$0xff]
      %v465 = vld [vmem:[%s4 + $0x50] sm:$0xf]
      %v466 = vld [vmem:[%s4 + $0x54] sm:$0xff]
      %v467 = vld [vmem:[%s4 + $0x5c] sm:$0xf]
      %v468 = vld [vmem:[%s4 + $0x60] sm:$0xff]
      %v469 = vld [vmem:[%s4 + $0x68] sm:$0xf]
      %v470 = vld [vmem:[%s4 + $0x6c] sm:$0xff]
      %v471 = vld [vmem:[%s4 + $0x74] sm:$0xf]
      %v472 = vld [vmem:[%s4 + $0x78] sm:$0xff]
      %v473 = vld [vmem:[%s4 + $0x80] sm:$0xf]
      %v474 = vld [vmem:[%s4 + $0x84] sm:$0xff]
      %v475 = vld [vmem:[%s4 + $0x8c] sm:$0xf]
      %v476 = vld [vmem:[%s4 + $0x90] sm:$0xff]
      %v477 = vld [vmem:[%s4 + $0x98] sm:$0xf]
      %v478 = vld [vmem:[%s4 + $0x9c] sm:$0xff]
      %v479 = vld [vmem:[%s4 + $0xa4] sm:$0xf]
      %v480 = vld [vmem:[%s4 + $0xa8] sm:$0xff]
      %v481 = vld [vmem:[%s4 + $0xb0] sm:$0xf]
      %v482 = vld [vmem:[%s4 + $0xb4] sm:$0xff]
      %v483 = vld [vmem:[%s4 + $0xbc] sm:$0xf]
      %v484 = vld [vmem:[%s4 + $0xc0] sm:$0xff]
      %v485 = vld [vmem:[%s4 + $0xc8] sm:$0xf]
      %v486 = vld [vmem:[%s4 + $0xcc] sm:$0xff]
      %v487 = vld [vmem:[%s4 + $0xd4] sm:$0xf]
      %v488 = vld [vmem:[%s4 + $0xd8] sm:$0xff]
      %v489 = vld [vmem:[%s4 + $0xe0] sm:$0xf]
      %v490 = vld [vmem:[%s4 + $0xe4] sm:$0xff]
      %v491 = vld [vmem:[%s4 + $0xec] sm:$0xf]
      %v492 = vld [vmem:[%s4 + $0xf0] sm:$0xff]
      %v493 = vld [vmem:[%s4 + $0xf8] sm:$0xf]
      %v494 = vld [vmem:[%s4 + $0xfc] sm:$0xff]
      %v495 = vld [vmem:[%s4 + $0x104] sm:$0xf]
      %v496 = vld [vmem:[%s4 + $0x108] sm:$0xff]
      %v497 = vld [vmem:[%s4 + $0x110] sm:$0xf]
      %v498 = vld [vmem:[%s4 + $0x114] sm:$0xff]
      %v499 = vld [vmem:[%s4 + $0x11c] sm:$0xf]
      %v500 = vld [vmem:[%s5] sm:$0xff]
      %v501 = vld [vmem:[%s5 + $0x8] sm:$0xf]
      %v502 = vld [vmem:[%s5 + $0xc] sm:$0xff]
      %v503 = vld [vmem:[%s5 + $0x14] sm:$0xf]
      %v504 = vld [vmem:[%s5 + $0x18] sm:$0xff]
      %v505 = vld [vmem:[%s5 + $0x20] sm:$0xf]
      %v506 = vld [vmem:[%s5 + $0x24] sm:$0xff]
      %v507 = vld [vmem:[%s5 + $0x2c] sm:$0xf]
      %v508 = vld [vmem:[%s5 + $0x30] sm:$0xff]
      %v509 = vld [vmem:[%s5 + $0x38] sm:$0xf]
      %v510 = vld [vmem:[%s5 + $0x3c] sm:$0xff]
      %v511 = vld [vmem:[%s5 + $0x44] sm:$0xf]
      %v512 = vld [vmem:[%s5 + $0x48] sm:$0xff]
      %v513 = vld [vmem:[%s5 + $0x50] sm:$0xf]
      %v514 = vld [vmem:[%s5 + $0x54] sm:$0xff]
      %v515 = vld [vmem:[%s5 + $0x5c] sm:$0xf]
      %v516 = vld [vmem:[%s5 + $0x60] sm:$0xff]
      %v517 = vld [vmem:[%s5 + $0x68] sm:$0xf]
      %v518 = vld [vmem:[%s5 + $0x6c] sm:$0xff]
      %v519 = vld [vmem:[%s5 + $0x74] sm:$0xf]
      %v520 = vld [vmem:[%s5 + $0x78] sm:$0xff]
      %v521 = vld [vmem:[%s5 + $0x80] sm:$0xf]
      %v522 = vld [vmem:[%s5 + $0x84] sm:$0xff]
      %v523 = vld [vmem:[%s5 + $0x8c] sm:$0xf]
      %v524 = vld [vmem:[%s5 + $0x90] sm:$0xff]
      %v525 = vld [vmem:[%s5 + $0x98] sm:$0xf]
      %v526 = vld [vmem:[%s5 + $0x9c] sm:$0xff]
      %v527 = vld [vmem:[%s5 + $0xa4] sm:$0xf]
      %v528 = vld [vmem:[%s5 + $0xa8] sm:$0xff]
      %v529 = vld [vmem:[%s5 + $0xb0] sm:$0xf]
      %v530 = vld [vmem:[%s5 + $0xb4] sm:$0xff]
      %v531 = vld [vmem:[%s5 + $0xbc] sm:$0xf]
      %v532 = vld [vmem:[%s436] sm:$0xff]
      %v533 = vld [vmem:[%s436 + $0x8] sm:$0xff]
      %v534 = vld [vmem:[%s436 + $0x10] sm:$0xff]
      %v535 = vtanh.pop %v532
      %v536 = vtanh.pop %v533
      %v537 = vtanh.pop %v534
      %v538 = vpack.c.bf16 %v535, %v535
      %v539 = vpack.c.bf16 %v536, %v536
      %v540 = vpack.c.bf16 %v537, %v537
      %v541 = vld [vmem:[%s1] sm:$0xf]
      %v542 = vld [vmem:[%s1 + $0x4] sm:$0xf]
      %v543 = vld [vmem:[%s1 + $0x8] sm:$0xf]
      %v544 = vld [vmem:[%s1 + $0xc] sm:$0xf]
      %v545 = vld [vmem:[%s1 + $0x10] sm:$0xf]
      %v546 = vld [vmem:[%s1 + $0x14] sm:$0xf]
      %v547 = vld [vmem:[%s1 + $0x18] sm:$0xf]
      %v548 = vld [vmem:[%s1 + $0x1c] sm:$0xf]
      %v549 = vld [vmem:[%s1 + $0x20] sm:$0xf]
      %v550 = vld [vmem:[%s1 + $0x24] sm:$0xf]
      %v551 = vld [vmem:[%s1 + $0x28] sm:$0xf]
      %v552 = vld [vmem:[%s1 + $0x2c] sm:$0xf]
      %v553 = vld [vmem:[%s1 + $0x30] sm:$0xf]
      %v554 = vld [vmem:[%s1 + $0x34] sm:$0xf]
      %v555 = vld [vmem:[%s1 + $0x38] sm:$0xf]
      %v556 = vld [vmem:[%s1 + $0x3c] sm:$0xf]
      %v557 = vld [vmem:[%s1 + $0x40] sm:$0xf]
      %v558 = vld [vmem:[%s1 + $0x44] sm:$0xf]
      %v559 = vld [vmem:[%s1 + $0x48] sm:$0xf]
      %v560 = vld [vmem:[%s1 + $0x4c] sm:$0xf]
      %v561 = vld [vmem:[%s1 + $0x50] sm:$0xf]
      %v562 = vld [vmem:[%s1 + $0x54] sm:$0xf]
      %v563 = vld [vmem:[%s1 + $0x58] sm:$0xf]
      %v564 = vld [vmem:[%s1 + $0x5c] sm:$0xf]
      %v565 = vld [vmem:[%s1 + $0x60] sm:$0xf]
      %v566 = vld [vmem:[%s1 + $0x64] sm:$0xf]
      %v567 = vld [vmem:[%s1 + $0x68] sm:$0xf]
      %v568 = vld [vmem:[%s1 + $0x6c] sm:$0xf]
      %v569 = vld [vmem:[%s1 + $0x70] sm:$0xf]
      %v570 = vld [vmem:[%s1 + $0x74] sm:$0xf]
      %v571 = vld [vmem:[%s1 + $0x78] sm:$0xf]
      %v572 = vld [vmem:[%s1 + $0x7c] sm:$0xf]
      %v573 = vld [vmem:[%s1 + $0x80] sm:$0xf]
      %v574 = vld [vmem:[%s1 + $0x84] sm:$0xf]
      %v575 = vld [vmem:[%s1 + $0x88] sm:$0xf]
      %v576 = vld [vmem:[%s1 + $0x8c] sm:$0xf]
      %v577 = vld [vmem:[%s1 + $0x90] sm:$0xf]
      %v578 = vld [vmem:[%s1 + $0x94] sm:$0xf]
      %v579 = vld [vmem:[%s1 + $0x98] sm:$0xf]
      %v580 = vld [vmem:[%s1 + $0x9c] sm:$0xf]
      %v581 = vld [vmem:[%s1 + $0xa0] sm:$0xf]
      %v582 = vld [vmem:[%s1 + $0xa4] sm:$0xf]
      %v583 = vld [vmem:[%s1 + $0xa8] sm:$0xf]
      %v584 = vld [vmem:[%s1 + $0xac] sm:$0xf]
      %v585 = vld [vmem:[%s1 + $0xb0] sm:$0xf]
      %v586 = vld [vmem:[%s1 + $0xb4] sm:$0xf]
      %v587 = vld [vmem:[%s1 + $0xb8] sm:$0xf]
      %v588 = vld [vmem:[%s1 + $0xbc] sm:$0xf]
      %v589 = vld [vmem:[%s2] sm:$0x1]
      %v591 = vlaneseq
      %v592 = vshrl.u32 %v591, 7
      %v593 = vsub.s32 0, %v592
      %v594 = vrot.slane %v589, %v593
      %v644 = vunpack.c.l.b16 %v541
      %v645 = vunpack.c.l.b16 %v542
      %v646 = vunpack.c.l.b16 %v543
      %v647 = vunpack.c.l.b16 %v544
      %v648 = vunpack.c.l.b16 %v545
      %v649 = vunpack.c.l.b16 %v546
      %v650 = vunpack.c.l.b16 %v547
      %v651 = vunpack.c.l.b16 %v548
      %v652 = vunpack.c.l.b16 %v549
      %v653 = vunpack.c.l.b16 %v550
      %v654 = vunpack.c.l.b16 %v551
      %v655 = vunpack.c.l.b16 %v552
      %v656 = vunpack.c.l.b16 %v553
      %v657 = vunpack.c.l.b16 %v554
      %v658 = vunpack.c.l.b16 %v555
      %v659 = vunpack.c.l.b16 %v556
      %v660 = vunpack.c.l.b16 %v557
      %v661 = vunpack.c.l.b16 %v558
      %v662 = vunpack.c.l.b16 %v559
      %v663 = vunpack.c.l.b16 %v560
      %v664 = vunpack.c.l.b16 %v561
      %v665 = vunpack.c.l.b16 %v562
      %v666 = vunpack.c.l.b16 %v563
      %v667 = vunpack.c.l.b16 %v564
      %v668 = vunpack.c.l.b16 %v565
      %v669 = vunpack.c.l.b16 %v566
      %v670 = vunpack.c.l.b16 %v567
      %v671 = vunpack.c.l.b16 %v568
      %v672 = vunpack.c.l.b16 %v569
      %v673 = vunpack.c.l.b16 %v570
      %v674 = vunpack.c.l.b16 %v571
      %v675 = vunpack.c.l.b16 %v572
      %v676 = vunpack.c.l.b16 %v573
      %v677 = vunpack.c.l.b16 %v574
      %v678 = vunpack.c.l.b16 %v575
      %v679 = vunpack.c.l.b16 %v576
      %v680 = vunpack.c.l.b16 %v577
      %v681 = vunpack.c.l.b16 %v578
      %v682 = vunpack.c.l.b16 %v579
      %v683 = vunpack.c.l.b16 %v580
      %v684 = vunpack.c.l.b16 %v581
      %v685 = vunpack.c.l.b16 %v582
      %v686 = vunpack.c.l.b16 %v583
      %v687 = vunpack.c.l.b16 %v584
      %v688 = vunpack.c.l.b16 %v585
      %v689 = vunpack.c.l.b16 %v586
      %v690 = vunpack.c.l.b16 %v587
      %v691 = vunpack.c.l.b16 %v588
      %v692 = vpack.c.b16 %v645, %v644
      %v693 = vpack.c.b16 %v647, %v646
      %v694 = vpack.c.b16 %v649, %v648
      %v695 = vpack.c.b16 %v651, %v650
      %v696 = vpack.c.b16 %v653, %v652
      %v697 = vpack.c.b16 %v655, %v654
      %v698 = vpack.c.b16 %v657, %v656
      %v699 = vpack.c.b16 %v659, %v658
      %v700 = vpack.c.b16 %v661, %v660
      %v701 = vpack.c.b16 %v663, %v662
      %v702 = vpack.c.b16 %v665, %v664
      %v703 = vpack.c.b16 %v667, %v666
      %v704 = vpack.c.b16 %v669, %v668
      %v705 = vpack.c.b16 %v671, %v670
      %v706 = vpack.c.b16 %v673, %v672
      %v707 = vpack.c.b16 %v675, %v674
      %v708 = vpack.c.b16 %v677, %v676
      %v709 = vpack.c.b16 %v679, %v678
      %v710 = vpack.c.b16 %v681, %v680
      %v711 = vpack.c.b16 %v683, %v682
      %v712 = vpack.c.b16 %v685, %v684
      %v713 = vpack.c.b16 %v687, %v686
      %v714 = vpack.c.b16 %v689, %v688
      %v715 = vpack.c.b16 %v691, %v690
      %740 = vmatprep.subr.bf16.mxu0 0
      %741 = vmatpush1.bf16.msra.mxu0 %v699
      %742 = vmatprep.subr.bf16.mxu0 0
      %743 = vmatpush1.bf16.msra.mxu0 %v698
      %744 = vmatprep.subr.bf16.mxu0 0
      %745 = vmatpush1.bf16.msra.mxu0 %v697
      %746 = vmatprep.subr.bf16.mxu0 0
      %747 = vmatpush1.bf16.msra.mxu0 %v696
      %748 = vmatprep.subr.bf16.mxu0 0
      %749 = vmatpush1.bf16.msra.mxu0 %v695
      %750 = vmatprep.subr.bf16.mxu0 0
      %751 = vmatpush1.bf16.msra.mxu0 %v694
      %752 = vmatprep.subr.bf16.mxu0 0
      %753 = vmatpush1.bf16.msra.mxu0 %v693
      %754 = vmatprep.subr.bf16.mxu0 0
      %755 = vmatpush1.bf16.msra.mxu0 %v692
      %756 = vmatprep.subr.bf16.mxu0 0
      %757 = vmatpush2.bf16.msra.mxu0 %v707
      %758 = vmatprep.subr.bf16.mxu0 0
      %759 = vmatpush2.bf16.msra.mxu0 %v706
      %760 = vmatprep.subr.bf16.mxu0 0
      %761 = vmatpush2.bf16.msra.mxu0 %v705
      %762 = vmatprep.subr.bf16.mxu0 0
      %763 = vmatpush2.bf16.msra.mxu0 %v704
      %764 = vmatprep.subr.bf16.mxu0 0
      %765 = vmatpush2.bf16.msra.mxu0 %v703
      %766 = vmatprep.subr.bf16.mxu0 0
      %767 = vmatpush2.bf16.msra.mxu0 %v702
      %768 = vmatprep.subr.bf16.mxu0 0
      %769 = vmatpush2.bf16.msra.mxu0 %v701
      %770 = vmatprep.subr.bf16.mxu0 0
      %771 = vmatpush2.bf16.msra.mxu0 %v700
      %772 = vmatprep.mubr.bf16.mxu0 %v539
      %773 = vmatmul.mubr.bf16.gmra.mxu0 %v538
      %v774 = vpop.f32.mrf.mxu0
      %v775 = vadd.f32 %v594, %v774
      %v776 = vpop.f32.mrf.mxu0
      %v777 = vpop.f32.mrf.mxu0
      %v778 = vpop.f32.mrf.mxu0
      %779 = vdwg.mxu0
      %780 = vmatprep.subr.bf16.mxu0 0
      %781 = vmatpush1.bf16.msra.mxu0 %v715
      %782 = vmatprep.subr.bf16.mxu0 0
      %783 = vmatpush1.bf16.msra.mxu0 %v714
      %784 = vmatprep.subr.bf16.mxu0 0
      %785 = vmatpush1.bf16.msra.mxu0 %v713
      %786 = vmatprep.subr.bf16.mxu0 0
      %787 = vmatpush1.bf16.msra.mxu0 %v712
      %788 = vmatprep.subr.bf16.mxu0 0
      %789 = vmatpush1.bf16.msra.mxu0 %v711
      %790 = vmatprep.subr.bf16.mxu0 0
      %791 = vmatpush1.bf16.msra.mxu0 %v710
      %792 = vmatprep.subr.bf16.mxu0 0
      %793 = vmatpush1.bf16.msra.mxu0 %v709
      %794 = vmatprep.subr.bf16.mxu0 0
      %795 = vmatpush1.bf16.msra.mxu0 %v708
      %796 = vmatprep.subr.bf16.mxu0 0
      %797 = vmatpush2.bf16.msra.mxu0 0
      %798 = vmatprep.subr.bf16.mxu0 0
      %799 = vmatpush2.bf16.msra.mxu0 0
      %800 = vmatprep.subr.bf16.mxu0 0
      %801 = vmatpush2.bf16.msra.mxu0 0
      %802 = vmatprep.subr.bf16.mxu0 0
      %803 = vmatpush2.bf16.msra.mxu0 0
      %804 = vmatprep.subr.bf16.mxu0 0
      %805 = vmatpush2.bf16.msra.mxu0 0
      %806 = vmatprep.subr.bf16.mxu0 0
      %807 = vmatpush2.bf16.msra.mxu0 0
      %808 = vmatprep.subr.bf16.mxu0 0
      %809 = vmatpush2.bf16.msra.mxu0 0
      %810 = vmatprep.subr.bf16.mxu0 0
      %811 = vmatpush2.bf16.msra.mxu0 0
      %812 = vmatprep.mubr.bf16.mxu0 0
      %813 = vmatmul.mubr.bf16.gmra.mxu0 %v540
      %v814 = vpop.f32.mrf.mxu0
      %v815 = vadd.f32 %v775, %v814
      %v816 = vpop.f32.mrf.mxu0
      %v817 = vpop.f32.mrf.mxu0
      %v818 = vpop.f32.mrf.mxu0
      %819 = vdwg.mxu0
      %v820 = vpack.c.bf16 %v815, %v815
      %v821 = vld [vmem:[%s6] sm:$0x7]
      %v823 = vlaneseq
      %v824 = vshrl.u32 %v823, 7
      %v825 = vsub.s32 0, %v824
      %v826 = vrot.slane %v821, %v825
      %v827 = vlaneseq
      %v828 = vshrl.u32 %v827, 7
      %v829 = vsub.s32 1, %v828
      %v830 = vrot.slane %v821, %v829
      %v831 = vlaneseq
      %v832 = vshrl.u32 %v831, 7
      %v833 = vsub.s32 2, %v832
      %v834 = vrot.slane %v821, %v833
      %v854 = vunpack.c.l.b16 %v484
      %v855 = vunpack.c.h.b16 %v484
      %v856 = vunpack.c.l.b16 %v485
      %v857 = vunpack.c.l.b16 %v486
      %v858 = vunpack.c.h.b16 %v486
      %v859 = vunpack.c.l.b16 %v487
      %v860 = vunpack.c.l.b16 %v488
      %v861 = vunpack.c.h.b16 %v488
      %v862 = vunpack.c.l.b16 %v489
      %v863 = vunpack.c.l.b16 %v490
      %v864 = vunpack.c.h.b16 %v490
      %v865 = vunpack.c.l.b16 %v491
      %v866 = vunpack.c.l.b16 %v492
      %v867 = vunpack.c.h.b16 %v492
      %v868 = vunpack.c.l.b16 %v493
      %v869 = vunpack.c.l.b16 %v494
      %v870 = vunpack.c.h.b16 %v494
      %v871 = vunpack.c.l.b16 %v495
      %v872 = vunpack.c.l.b16 %v496
      %v873 = vunpack.c.h.b16 %v496
      %v874 = vunpack.c.l.b16 %v497
      %v875 = vunpack.c.l.b16 %v498
      %v876 = vunpack.c.h.b16 %v498
      %v877 = vunpack.c.l.b16 %v499
      %v878 = vpack.c.b16 %v857, %v854
      %v879 = vpack.c.b16 %v858, %v855
      %v880 = vpack.c.b16 %v859, %v856
      %v881 = vpack.c.b16 %v863, %v860
      %v882 = vpack.c.b16 %v864, %v861
      %v883 = vpack.c.b16 %v865, %v862
      %v884 = vpack.c.b16 %v869, %v866
      %v885 = vpack.c.b16 %v870, %v867
      %v886 = vpack.c.b16 %v871, %v868
      %v887 = vpack.c.b16 %v875, %v872
      %v888 = vpack.c.b16 %v876, %v873
      %v889 = vpack.c.b16 %v877, %v874
      %vm902 = vcmask 523264
      %v904 = vsel %vm902, %v820, 0
      %906 = vmatprep.subr.bf16.mxu0 0
      %907 = vmatpush1.bf16.msra.mxu0 0
      %908 = vmatprep.subr.bf16.mxu0 0
      %909 = vmatpush1.bf16.msra.mxu0 0
      %910 = vmatprep.subr.bf16.mxu0 0
      %911 = vmatpush1.bf16.msra.mxu0 0
      %912 = vmatprep.subr.bf16.mxu0 0
      %913 = vmatpush1.bf16.msra.mxu0 0
      %914 = vmatprep.subr.bf16.mxu0 %v888
      %915 = vmatpush1.bf16.msra.mxu0 %v887
      %916 = vmatprep.subr.bf16.mxu0 %v885
      %917 = vmatpush1.bf16.msra.mxu0 %v884
      %918 = vmatprep.subr.bf16.mxu0 %v882
      %919 = vmatpush1.bf16.msra.mxu0 %v881
      %920 = vmatprep.subr.bf16.mxu0 %v879
      %921 = vmatpush1.bf16.msra.mxu0 %v878
      %922 = vmatprep.subr.bf16.mxu0 0
      %923 = vmatpush2.bf16.msra.mxu0 0
      %924 = vmatprep.subr.bf16.mxu0 0
      %925 = vmatpush2.bf16.msra.mxu0 0
      %926 = vmatprep.subr.bf16.mxu0 0
      %927 = vmatpush2.bf16.msra.mxu0 0
      %928 = vmatprep.subr.bf16.mxu0 0
      %929 = vmatpush2.bf16.msra.mxu0 0
      %930 = vmatprep.subr.bf16.mxu0 0
      %931 = vmatpush2.bf16.msra.mxu0 0
      %932 = vmatprep.subr.bf16.mxu0 0
      %933 = vmatpush2.bf16.msra.mxu0 0
      %934 = vmatprep.subr.bf16.mxu0 0
      %935 = vmatpush2.bf16.msra.mxu0 0
      %936 = vmatprep.subr.bf16.mxu0 0
      %937 = vmatpush2.bf16.msra.mxu0 0
      %938 = vmatprep.mubr.bf16.mxu0 0
      %939 = vmatmul.mubr.bf16.gmra.mxu0 %v904
      %v940 = vpop.f32.mrf.mxu0
      %v941 = vadd.f32 %v826, %v940
      %v942 = vpop.f32.mrf.mxu0
      %v943 = vadd.f32 %v830, %v942
      %v944 = vpop.f32.mrf.mxu0
      %v945 = vpop.f32.mrf.mxu0
      %946 = vdwg.mxu0
      %947 = vmatprep.subr.bf16.mxu0 0
      %948 = vmatpush1.bf16.msra.mxu0 0
      %949 = vmatprep.subr.bf16.mxu0 0
      %950 = vmatpush1.bf16.msra.mxu0 0
      %951 = vmatprep.subr.bf16.mxu0 0
      %952 = vmatpush1.bf16.msra.mxu0 0
      %953 = vmatprep.subr.bf16.mxu0 0
      %954 = vmatpush1.bf16.msra.mxu0 0
      %955 = vmatprep.subr.bf16.mxu0 0
      %956 = vmatpush1.bf16.msra.mxu0 %v889
      %957 = vmatprep.subr.bf16.mxu0 0
      %958 = vmatpush1.bf16.msra.mxu0 %v886
      %959 = vmatprep.subr.bf16.mxu0 0
      %960 = vmatpush1.bf16.msra.mxu0 %v883
      %961 = vmatprep.subr.bf16.mxu0 0
      %962 = vmatpush1.bf16.msra.mxu0 %v880
      %963 = vmatprep.subr.bf16.mxu0 0
      %964 = vmatpush2.bf16.msra.mxu0 0
      %965 = vmatprep.subr.bf16.mxu0 0
      %966 = vmatpush2.bf16.msra.mxu0 0
      %967 = vmatprep.subr.bf16.mxu0 0
      %968 = vmatpush2.bf16.msra.mxu0 0
      %969 = vmatprep.subr.bf16.mxu0 0
      %970 = vmatpush2.bf16.msra.mxu0 0
      %971 = vmatprep.subr.bf16.mxu0 0
      %972 = vmatpush2.bf16.msra.mxu0 0
      %973 = vmatprep.subr.bf16.mxu0 0
      %974 = vmatpush2.bf16.msra.mxu0 0
      %975 = vmatprep.subr.bf16.mxu0 0
      %976 = vmatpush2.bf16.msra.mxu0 0
      %977 = vmatprep.subr.bf16.mxu0 0
      %978 = vmatpush2.bf16.msra.mxu0 0
      %979 = vmatprep.mubr.bf16.mxu0 0
      %980 = vmatmul.mubr.bf16.gmra.mxu0 %v904
      %v981 = vpop.f32.mrf.mxu0
      %v982 = vadd.f32 %v834, %v981
      %v983 = vpop.f32.mrf.mxu0
      %v984 = vpop.f32.mrf.mxu0
      %v985 = vpop.f32.mrf.mxu0
      %986 = vdwg.mxu0
      %v987 = vld [vmem:[%s7] sm:$0x1]
      %v988 = vld [vmem:[%s441] sm:$0xff]
      %v989 = vld [vmem:[%s441 + $0x8] sm:$0xff]
      %v990 = vld [vmem:[%s441 + $0x10] sm:$0xff]
      %v991 = vld [vmem:[%s441 + $0x18] sm:$0xff]
      %v992 = vld [vmem:[%s441 + $0x20] sm:$0xff]
      %v993 = vld [vmem:[%s441 + $0x28] sm:$0xff]
      %v994 = vld [vmem:[%s441 + $0x30] sm:$0xff]
      %v995 = vld [vmem:[%s441 + $0x38] sm:$0xff]
      %v996 = vpack.c.bf16 %v989, %v988
      %v997 = vpack.c.bf16 %v991, %v990
      %v998 = vpack.c.bf16 %v993, %v992
      %v999 = vpack.c.bf16 %v995, %v994
      %v1032 = vunpack.c.l.b16 %v452
      %v1033 = vunpack.c.h.b16 %v452
      %v1034 = vunpack.c.l.b16 %v453
      %v1035 = vunpack.c.l.b16 %v454
      %v1036 = vunpack.c.h.b16 %v454
      %v1037 = vunpack.c.l.b16 %v455
      %v1038 = vunpack.c.l.b16 %v456
      %v1039 = vunpack.c.h.b16 %v456
      %v1040 = vunpack.c.l.b16 %v457
      %v1041 = vunpack.c.l.b16 %v458
      %v1042 = vunpack.c.h.b16 %v458
      %v1043 = vunpack.c.l.b16 %v459
      %v1044 = vunpack.c.l.b16 %v460
      %v1045 = vunpack.c.h.b16 %v460
      %v1046 = vunpack.c.l.b16 %v461
      %v1047 = vunpack.c.l.b16 %v462
      %v1048 = vunpack.c.h.b16 %v462
      %v1049 = vunpack.c.l.b16 %v463
      %v1050 = vunpack.c.l.b16 %v464
      %v1051 = vunpack.c.h.b16 %v464
      %v1052 = vunpack.c.l.b16 %v465
      %v1053 = vunpack.c.l.b16 %v466
      %v1054 = vunpack.c.h.b16 %v466
      %v1055 = vunpack.c.l.b16 %v467
      %v1056 = vunpack.c.l.b16 %v468
      %v1057 = vunpack.c.h.b16 %v468
      %v1058 = vunpack.c.l.b16 %v469
      %v1059 = vunpack.c.l.b16 %v470
      %v1060 = vunpack.c.h.b16 %v470
      %v1061 = vunpack.c.l.b16 %v471
      %v1062 = vunpack.c.l.b16 %v472
      %v1063 = vunpack.c.h.b16 %v472
      %v1064 = vunpack.c.l.b16 %v473
      %v1065 = vunpack.c.l.b16 %v474
      %v1066 = vunpack.c.h.b16 %v474
      %v1067 = vunpack.c.l.b16 %v475
      %v1068 = vunpack.c.l.b16 %v476
      %v1069 = vunpack.c.h.b16 %v476
      %v1070 = vunpack.c.l.b16 %v477
      %v1071 = vunpack.c.l.b16 %v478
      %v1072 = vunpack.c.h.b16 %v478
      %v1073 = vunpack.c.l.b16 %v479
      %v1074 = vunpack.c.l.b16 %v480
      %v1075 = vunpack.c.h.b16 %v480
      %v1076 = vunpack.c.l.b16 %v481
      %v1077 = vunpack.c.l.b16 %v482
      %v1078 = vunpack.c.h.b16 %v482
      %v1079 = vunpack.c.l.b16 %v483
      %v1080 = vpack.c.b16 %v1035, %v1032
      %v1081 = vpack.c.b16 %v1036, %v1033
      %v1082 = vpack.c.b16 %v1037, %v1034
      %v1083 = vpack.c.b16 %v1041, %v1038
      %v1084 = vpack.c.b16 %v1042, %v1039
      %v1085 = vpack.c.b16 %v1043, %v1040
      %v1086 = vpack.c.b16 %v1047, %v1044
      %v1087 = vpack.c.b16 %v1048, %v1045
      %v1088 = vpack.c.b16 %v1049, %v1046
      %v1089 = vpack.c.b16 %v1053, %v1050
      %v1090 = vpack.c.b16 %v1054, %v1051
      %v1091 = vpack.c.b16 %v1055, %v1052
      %v1092 = vpack.c.b16 %v1059, %v1056
      %v1093 = vpack.c.b16 %v1060, %v1057
      %v1094 = vpack.c.b16 %v1061, %v1058
      %v1095 = vpack.c.b16 %v1065, %v1062
      %v1096 = vpack.c.b16 %v1066, %v1063
      %v1097 = vpack.c.b16 %v1067, %v1064
      %v1098 = vpack.c.b16 %v1071, %v1068
      %v1099 = vpack.c.b16 %v1072, %v1069
      %v1100 = vpack.c.b16 %v1073, %v1070
      %v1101 = vpack.c.b16 %v1077, %v1074
      %v1102 = vpack.c.b16 %v1078, %v1075
      %v1103 = vpack.c.b16 %v1079, %v1076
      %1128 = vmatprep.subr.bf16.mxu0 %v1102
      %1129 = vmatpush1.bf16.msra.mxu0 %v1101
      %1130 = vmatprep.subr.bf16.mxu0 %v1099
      %1131 = vmatpush1.bf16.msra.mxu0 %v1098
      %1132 = vmatprep.subr.bf16.mxu0 %v1096
      %1133 = vmatpush1.bf16.msra.mxu0 %v1095
      %1134 = vmatprep.subr.bf16.mxu0 %v1093
      %1135 = vmatpush1.bf16.msra.mxu0 %v1092
      %1136 = vmatprep.subr.bf16.mxu0 %v1090
      %1137 = vmatpush1.bf16.msra.mxu0 %v1089
      %1138 = vmatprep.subr.bf16.mxu0 %v1087
      %1139 = vmatpush1.bf16.msra.mxu0 %v1086
      %1140 = vmatprep.subr.bf16.mxu0 %v1084
      %1141 = vmatpush1.bf16.msra.mxu0 %v1083
      %1142 = vmatprep.subr.bf16.mxu0 %v1081
      %1143 = vmatpush1.bf16.msra.mxu0 %v1080
      %1144 = vmatprep.subr.bf16.mxu0 0
      %1145 = vmatpush2.bf16.msra.mxu0 0
      %1146 = vmatprep.subr.bf16.mxu0 0
      %1147 = vmatpush2.bf16.msra.mxu0 0
      %1148 = vmatprep.subr.bf16.mxu0 0
      %1149 = vmatpush2.bf16.msra.mxu0 0
      %1150 = vmatprep.subr.bf16.mxu0 0
      %1151 = vmatpush2.bf16.msra.mxu0 0
      %1152 = vmatprep.subr.bf16.mxu0 0
      %1153 = vmatpush2.bf16.msra.mxu0 0
      %1154 = vmatprep.subr.bf16.mxu0 0
      %1155 = vmatpush2.bf16.msra.mxu0 0
      %1156 = vmatprep.subr.bf16.mxu0 0
      %1157 = vmatpush2.bf16.msra.mxu0 0
      %1158 = vmatprep.subr.bf16.mxu0 0
      %1159 = vmatpush2.bf16.msra.mxu0 0
      %1160 = vmatprep.mubr.bf16.mxu0 0
      %1161 = vmatmul.mubr.bf16.gmra.mxu0 %v996
      %v1162 = vpop.f32.mrf.mxu0
      %v1163 = vadd.f32 0.0, %v1162
      %v1164 = vpop.f32.mrf.mxu0
      %v1165 = vadd.f32 0.0, %v1164
      %v1166 = vpop.f32.mrf.mxu0
      %v1167 = vadd.f32 0.0, %v1166
      %v1168 = vpop.f32.mrf.mxu0
      %v1169 = vadd.f32 0.0, %v1168
      %1170 = vmatprep.mubr.bf16.mxu0 0
      %1171 = vmatmul.mubr.bf16.gmra.mxu0 %v997
      %v1172 = vpop.f32.mrf.mxu0
      %v1173 = vadd.f32 0.0, %v1172
      %v1174 = vpop.f32.mrf.mxu0
      %v1175 = vadd.f32 0.0, %v1174
      %v1176 = vpop.f32.mrf.mxu0
      %v1177 = vadd.f32 0.0, %v1176
      %v1178 = vpop.f32.mrf.mxu0
      %v1179 = vadd.f32 0.0, %v1178
      %1180 = vmatprep.mubr.bf16.mxu0 0
      %1181 = vmatmul.mubr.bf16.gmra.mxu0 %v998
      %v1182 = vpop.f32.mrf.mxu0
      %v1183 = vadd.f32 0.0, %v1182
      %v1184 = vpop.f32.mrf.mxu0
      %v1185 = vadd.f32 0.0, %v1184
      %v1186 = vpop.f32.mrf.mxu0
      %v1187 = vadd.f32 0.0, %v1186
      %v1188 = vpop.f32.mrf.mxu0
      %v1189 = vadd.f32 0.0, %v1188
      %1190 = vmatprep.mubr.bf16.mxu0 0
      %1191 = vmatmul.mubr.bf16.gmra.mxu0 %v999
      %v1192 = vpop.f32.mrf.mxu0
      %v1193 = vadd.f32 0.0, %v1192
      %v1194 = vpop.f32.mrf.mxu0
      %v1195 = vadd.f32 0.0, %v1194
      %v1196 = vpop.f32.mrf.mxu0
      %v1197 = vadd.f32 0.0, %v1196
      %v1198 = vpop.f32.mrf.mxu0
      %v1199 = vadd.f32 0.0, %v1198
      %1200 = vdwg.mxu0
      %1201 = vmatprep.subr.bf16.mxu0 0
      %1202 = vmatpush1.bf16.msra.mxu0 %v1103
      %1203 = vmatprep.subr.bf16.mxu0 0
      %1204 = vmatpush1.bf16.msra.mxu0 %v1100
      %1205 = vmatprep.subr.bf16.mxu0 0
      %1206 = vmatpush1.bf16.msra.mxu0 %v1097
      %1207 = vmatprep.subr.bf16.mxu0 0
      %1208 = vmatpush1.bf16.msra.mxu0 %v1094
      %1209 = vmatprep.subr.bf16.mxu0 0
      %1210 = vmatpush1.bf16.msra.mxu0 %v1091
      %1211 = vmatprep.subr.bf16.mxu0 0
      %1212 = vmatpush1.bf16.msra.mxu0 %v1088
      %1213 = vmatprep.subr.bf16.mxu0 0
      %1214 = vmatpush1.bf16.msra.mxu0 %v1085
      %1215 = vmatprep.subr.bf16.mxu0 0
      %1216 = vmatpush1.bf16.msra.mxu0 %v1082
      %1217 = vmatprep.subr.bf16.mxu0 0
      %1218 = vmatpush2.bf16.msra.mxu0 0
      %1219 = vmatprep.subr.bf16.mxu0 0
      %1220 = vmatpush2.bf16.msra.mxu0 0
      %1221 = vmatprep.subr.bf16.mxu0 0
      %1222 = vmatpush2.bf16.msra.mxu0 0
      %1223 = vmatprep.subr.bf16.mxu0 0
      %1224 = vmatpush2.bf16.msra.mxu0 0
      %1225 = vmatprep.subr.bf16.mxu0 0
      %1226 = vmatpush2.bf16.msra.mxu0 0
      %1227 = vmatprep.subr.bf16.mxu0 0
      %1228 = vmatpush2.bf16.msra.mxu0 0
      %1229 = vmatprep.subr.bf16.mxu0 0
      %1230 = vmatpush2.bf16.msra.mxu0 0
      %1231 = vmatprep.subr.bf16.mxu0 0
      %1232 = vmatpush2.bf16.msra.mxu0 0
      %1233 = vmatprep.mubr.bf16.mxu0 0
      %1234 = vmatmul.mubr.bf16.gmra.mxu0 %v996
      %v1235 = vpop.f32.mrf.mxu0
      %v1236 = vadd.f32 0.0, %v1235
      %v1237 = vpop.f32.mrf.mxu0
      %v1238 = vpop.f32.mrf.mxu0
      %v1239 = vadd.f32 0.0, %v1238
      %v1240 = vpop.f32.mrf.mxu0
      %1241 = vmatprep.mubr.bf16.mxu0 0
      %1242 = vmatmul.mubr.bf16.gmra.mxu0 %v997
      %v1243 = vpop.f32.mrf.mxu0
      %v1244 = vadd.f32 0.0, %v1243
      %v1245 = vpop.f32.mrf.mxu0
      %v1246 = vpop.f32.mrf.mxu0
      %v1247 = vadd.f32 0.0, %v1246
      %v1248 = vpop.f32.mrf.mxu0
      %1249 = vmatprep.mubr.bf16.mxu0 0
      %1250 = vmatmul.mubr.bf16.gmra.mxu0 %v998
      %v1251 = vpop.f32.mrf.mxu0
      %v1252 = vadd.f32 0.0, %v1251
      %v1253 = vpop.f32.mrf.mxu0
      %v1254 = vpop.f32.mrf.mxu0
      %v1255 = vadd.f32 0.0, %v1254
      %v1256 = vpop.f32.mrf.mxu0
      %1257 = vmatprep.mubr.bf16.mxu0 0
      %1258 = vmatmul.mubr.bf16.gmra.mxu0 %v999
      %v1259 = vpop.f32.mrf.mxu0
      %v1260 = vadd.f32 0.0, %v1259
      %v1261 = vpop.f32.mrf.mxu0
      %v1262 = vpop.f32.mrf.mxu0
      %v1263 = vadd.f32 0.0, %v1262
      %v1264 = vpop.f32.mrf.mxu0
      %1265 = vdwg.mxu0
      %v1266 = vadd.f32 %v1163, %v941
      %v1267 = vadd.f32 %v1165, %v943
      %v1268 = vadd.f32 %v1236, %v982
      %v1301 = vunpack.c.l.b16 %v500
      %v1302 = vunpack.c.h.b16 %v500
      %v1303 = vunpack.c.l.b16 %v501
      %v1304 = vunpack.c.l.b16 %v502
      %v1305 = vunpack.c.h.b16 %v502
      %v1306 = vunpack.c.l.b16 %v503
      %v1307 = vunpack.c.l.b16 %v504
      %v1308 = vunpack.c.h.b16 %v504
      %v1309 = vunpack.c.l.b16 %v505
      %v1310 = vunpack.c.l.b16 %v506
      %v1311 = vunpack.c.h.b16 %v506
      %v1312 = vunpack.c.l.b16 %v507
      %v1313 = vunpack.c.l.b16 %v508
      %v1314 = vunpack.c.h.b16 %v508
      %v1315 = vunpack.c.l.b16 %v509
      %v1316 = vunpack.c.l.b16 %v510
      %v1317 = vunpack.c.h.b16 %v510
      %v1318 = vunpack.c.l.b16 %v511
      %v1319 = vunpack.c.l.b16 %v512
      %v1320 = vunpack.c.h.b16 %v512
      %v1321 = vunpack.c.l.b16 %v513
      %v1322 = vunpack.c.l.b16 %v514
      %v1323 = vunpack.c.h.b16 %v514
      %v1324 = vunpack.c.l.b16 %v515
      %v1325 = vunpack.c.l.b16 %v516
      %v1326 = vunpack.c.h.b16 %v516
      %v1327 = vunpack.c.l.b16 %v517
      %v1328 = vunpack.c.l.b16 %v518
      %v1329 = vunpack.c.h.b16 %v518
      %v1330 = vunpack.c.l.b16 %v519
      %v1331 = vunpack.c.l.b16 %v520
      %v1332 = vunpack.c.h.b16 %v520
      %v1333 = vunpack.c.l.b16 %v521
      %v1334 = vunpack.c.l.b16 %v522
      %v1335 = vunpack.c.h.b16 %v522
      %v1336 = vunpack.c.l.b16 %v523
      %v1337 = vunpack.c.l.b16 %v524
      %v1338 = vunpack.c.h.b16 %v524
      %v1339 = vunpack.c.l.b16 %v525
      %v1340 = vunpack.c.l.b16 %v526
      %v1341 = vunpack.c.h.b16 %v526
      %v1342 = vunpack.c.l.b16 %v527
      %v1343 = vunpack.c.l.b16 %v528
      %v1344 = vunpack.c.h.b16 %v528
      %v1345 = vunpack.c.l.b16 %v529
      %v1346 = vunpack.c.l.b16 %v530
      %v1347 = vunpack.c.h.b16 %v530
      %v1348 = vunpack.c.l.b16 %v531
      %v1349 = vpack.c.b16 %v1304, %v1301
      %v1350 = vpack.c.b16 %v1305, %v1302
      %v1351 = vpack.c.b16 %v1306, %v1303
      %v1352 = vpack.c.b16 %v1310, %v1307
      %v1353 = vpack.c.b16 %v1311, %v1308
      %v1354 = vpack.c.b16 %v1312, %v1309
      %v1355 = vpack.c.b16 %v1316, %v1313
      %v1356 = vpack.c.b16 %v1317, %v1314
      %v1357 = vpack.c.b16 %v1318, %v1315
      %v1358 = vpack.c.b16 %v1322, %v1319
      %v1359 = vpack.c.b16 %v1323, %v1320
      %v1360 = vpack.c.b16 %v1324, %v1321
      %v1361 = vpack.c.b16 %v1328, %v1325
      %v1362 = vpack.c.b16 %v1329, %v1326
      %v1363 = vpack.c.b16 %v1330, %v1327
      %v1364 = vpack.c.b16 %v1334, %v1331
      %v1365 = vpack.c.b16 %v1335, %v1332
      %v1366 = vpack.c.b16 %v1336, %v1333
      %v1367 = vpack.c.b16 %v1340, %v1337
      %v1368 = vpack.c.b16 %v1341, %v1338
      %v1369 = vpack.c.b16 %v1342, %v1339
      %v1370 = vpack.c.b16 %v1346, %v1343
      %v1371 = vpack.c.b16 %v1347, %v1344
      %v1372 = vpack.c.b16 %v1348, %v1345
      %1397 = vmatprep.subr.bf16.mxu0 %v1371
      %1398 = vmatpush1.bf16.msra.mxu0 %v1370
      %1399 = vmatprep.subr.bf16.mxu0 %v1368
      %1400 = vmatpush1.bf16.msra.mxu0 %v1367
      %1401 = vmatprep.subr.bf16.mxu0 %v1365
      %1402 = vmatpush1.bf16.msra.mxu0 %v1364
      %1403 = vmatprep.subr.bf16.mxu0 %v1362
      %1404 = vmatpush1.bf16.msra.mxu0 %v1361
      %1405 = vmatprep.subr.bf16.mxu0 %v1359
      %1406 = vmatpush1.bf16.msra.mxu0 %v1358
      %1407 = vmatprep.subr.bf16.mxu0 %v1356
      %1408 = vmatpush1.bf16.msra.mxu0 %v1355
      %1409 = vmatprep.subr.bf16.mxu0 %v1353
      %1410 = vmatpush1.bf16.msra.mxu0 %v1352
      %1411 = vmatprep.subr.bf16.mxu0 %v1350
      %1412 = vmatpush1.bf16.msra.mxu0 %v1349
      %1413 = vmatprep.subr.bf16.mxu0 0
      %1414 = vmatpush2.bf16.msra.mxu0 0
      %1415 = vmatprep.subr.bf16.mxu0 0
      %1416 = vmatpush2.bf16.msra.mxu0 0
      %1417 = vmatprep.subr.bf16.mxu0 0
      %1418 = vmatpush2.bf16.msra.mxu0 0
      %1419 = vmatprep.subr.bf16.mxu0 0
      %1420 = vmatpush2.bf16.msra.mxu0 0
      %1421 = vmatprep.subr.bf16.mxu0 0
      %1422 = vmatpush2.bf16.msra.mxu0 0
      %1423 = vmatprep.subr.bf16.mxu0 0
      %1424 = vmatpush2.bf16.msra.mxu0 0
      %1425 = vmatprep.subr.bf16.mxu0 0
      %1426 = vmatpush2.bf16.msra.mxu0 0
      %1427 = vmatprep.subr.bf16.mxu0 0
      %1428 = vmatpush2.bf16.msra.mxu0 0
      %1429 = vmatprep.mubr.bf16.mxu0 0
      %1430 = vmatmul.mubr.bf16.gmra.mxu0 0
      %v1431 = vpop.f32.mrf.mxu0
      %v1432 = vadd.f32 0.0, %v1431
      %v1433 = vpop.f32.mrf.mxu0
      %v1434 = vadd.f32 0.0, %v1433
      %v1435 = vpop.f32.mrf.mxu0
      %v1436 = vpop.f32.mrf.mxu0
      %1437 = vdwg.mxu0
      %1438 = vmatprep.subr.bf16.mxu0 0
      %1439 = vmatpush1.bf16.msra.mxu0 %v1372
      %1440 = vmatprep.subr.bf16.mxu0 0
      %1441 = vmatpush1.bf16.msra.mxu0 %v1369
      %1442 = vmatprep.subr.bf16.mxu0 0
      %1443 = vmatpush1.bf16.msra.mxu0 %v1366
      %1444 = vmatprep.subr.bf16.mxu0 0
      %1445 = vmatpush1.bf16.msra.mxu0 %v1363
      %1446 = vmatprep.subr.bf16.mxu0 0
      %1447 = vmatpush1.bf16.msra.mxu0 %v1360
      %1448 = vmatprep.subr.bf16.mxu0 0
      %1449 = vmatpush1.bf16.msra.mxu0 %v1357
      %1450 = vmatprep.subr.bf16.mxu0 0
      %1451 = vmatpush1.bf16.msra.mxu0 %v1354
      %1452 = vmatprep.subr.bf16.mxu0 0
      %1453 = vmatpush1.bf16.msra.mxu0 %v1351
      %1454 = vmatprep.subr.bf16.mxu0 0
      %1455 = vmatpush2.bf16.msra.mxu0 0
      %1456 = vmatprep.subr.bf16.mxu0 0
      %1457 = vmatpush2.bf16.msra.mxu0 0
      %1458 = vmatprep.subr.bf16.mxu0 0
      %1459 = vmatpush2.bf16.msra.mxu0 0
      %1460 = vmatprep.subr.bf16.mxu0 0
      %1461 = vmatpush2.bf16.msra.mxu0 0
      %1462 = vmatprep.subr.bf16.mxu0 0
      %1463 = vmatpush2.bf16.msra.mxu0 0
      %1464 = vmatprep.subr.bf16.mxu0 0
      %1465 = vmatpush2.bf16.msra.mxu0 0
      %1466 = vmatprep.subr.bf16.mxu0 0
      %1467 = vmatpush2.bf16.msra.mxu0 0
      %1468 = vmatprep.subr.bf16.mxu0 0
      %1469 = vmatpush2.bf16.msra.mxu0 0
      %1470 = vmatprep.mubr.bf16.mxu0 0
      %1471 = vmatmul.mubr.bf16.gmra.mxu0 0
      %v1472 = vpop.f32.mrf.mxu0
      %v1473 = vadd.f32 0.0, %v1472
      %v1474 = vpop.f32.mrf.mxu0
      %v1475 = vpop.f32.mrf.mxu0
      %v1476 = vpop.f32.mrf.mxu0
      %1477 = vdwg.mxu0
      %v1478 = vadd.f32 %v1266, %v1432
      %v1479 = vadd.f32 %v1267, %v1434
      %v1480 = vxor.u32 %v1478, 2147483648
      %v1481 = vxor.u32 %v1479, 2147483648
      %v1482 = vmul.f32 %v1480, 1.442695
      %v1483 = vpow.pop %v1482
      %v1484 = vmul.f32 %v1481, 1.442695
      %v1485 = vpow.pop %v1484
      %v1486 = vadd.f32 %v1483, 1.0
      %v1487 = vadd.f32 %v1485, 1.0
      %v1488 = vrcp.pop %v1486
      %v1489 = vmul.f32 1.0, %v1488
      %v1490 = vrcp.pop %v1487
      %v1491 = vmul.f32 1.0, %v1490
      %v1493 = vlaneseq
      %v1494 = vshrl.u32 %v1493, 7
      %v1495 = vsub.s32 0, %v1494
      %v1496 = vrot.slane %v987, %v1495
      %v1498 = vadd.f32 %v1473, %v1496
      %v1499 = vmul.f32 %v1489, %v1498
      %v1500 = vadd.f32 %v1268, %v1499
      %v1501 = vtanh.pop %v1500
      %v1502 = vsub.f32 0.0, %v1501
      %v1503 = vmul.f32 %v1491, %v1502
      %v1504 = vadd.f32 %v1501, %v1503
      %v1505 = vadd.f32 %v1167, %v941
      %v1506 = vadd.f32 %v1169, %v943
      %v1507 = vadd.f32 %v1239, %v982
      %v1508 = vpack.c.bf16 %v1504, %v1504
      %1509 = vmatprep.subr.bf16.mxu0 %v1371
      %1510 = vmatpush1.bf16.msra.mxu0 %v1370
      %1511 = vmatprep.subr.bf16.mxu0 %v1368
      %1512 = vmatpush1.bf16.msra.mxu0 %v1367
      %1513 = vmatprep.subr.bf16.mxu0 %v1365
      %1514 = vmatpush1.bf16.msra.mxu0 %v1364
      %1515 = vmatprep.subr.bf16.mxu0 %v1362
      %1516 = vmatpush1.bf16.msra.mxu0 %v1361
      %1517 = vmatprep.subr.bf16.mxu0 %v1359
      %1518 = vmatpush1.bf16.msra.mxu0 %v1358
      %1519 = vmatprep.subr.bf16.mxu0 %v1356
      %1520 = vmatpush1.bf16.msra.mxu0 %v1355
      %1521 = vmatprep.subr.bf16.mxu0 %v1353
      %1522 = vmatpush1.bf16.msra.mxu0 %v1352
      %1523 = vmatprep.subr.bf16.mxu0 %v1350
      %1524 = vmatpush1.bf16.msra.mxu0 %v1349
      %1525 = vmatprep.subr.bf16.mxu0 0
      %1526 = vmatpush2.bf16.msra.mxu0 0
      %1527 = vmatprep.subr.bf16.mxu0 0
      %1528 = vmatpush2.bf16.msra.mxu0 0
      %1529 = vmatprep.subr.bf16.mxu0 0
      %1530 = vmatpush2.bf16.msra.mxu0 0
      %1531 = vmatprep.subr.bf16.mxu0 0
      %1532 = vmatpush2.bf16.msra.mxu0 0
      %1533 = vmatprep.subr.bf16.mxu0 0
      %1534 = vmatpush2.bf16.msra.mxu0 0
      %1535 = vmatprep.subr.bf16.mxu0 0
      %1536 = vmatpush2.bf16.msra.mxu0 0
      %1537 = vmatprep.subr.bf16.mxu0 0
      %1538 = vmatpush2.bf16.msra.mxu0 0
      %1539 = vmatprep.subr.bf16.mxu0 0
      %1540 = vmatpush2.bf16.msra.mxu0 0
      %1541 = vmatprep.mubr.bf16.mxu0 0
      %1542 = vmatmul.mubr.bf16.gmra.mxu0 %v1508
      %v1543 = vpop.f32.mrf.mxu0
      %v1544 = vadd.f32 0.0, %v1543
      %v1545 = vpop.f32.mrf.mxu0
      %v1546 = vadd.f32 0.0, %v1545
      %v1547 = vpop.f32.mrf.mxu0
      %v1548 = vpop.f32.mrf.mxu0
      %1549 = vdwg.mxu0
      %1550 = vmatprep.subr.bf16.mxu0 0
      %1551 = vmatpush1.bf16.msra.mxu0 %v1372
      %1552 = vmatprep.subr.bf16.mxu0 0
      %1553 = vmatpush1.bf16.msra.mxu0 %v1369
      %1554 = vmatprep.subr.bf16.mxu0 0
      %1555 = vmatpush1.bf16.msra.mxu0 %v1366
      %1556 = vmatprep.subr.bf16.mxu0 0
      %1557 = vmatpush1.bf16.msra.mxu0 %v1363
      %1558 = vmatprep.subr.bf16.mxu0 0
      %1559 = vmatpush1.bf16.msra.mxu0 %v1360
      %1560 = vmatprep.subr.bf16.mxu0 0
      %1561 = vmatpush1.bf16.msra.mxu0 %v1357
      %1562 = vmatprep.subr.bf16.mxu0 0
      %1563 = vmatpush1.bf16.msra.mxu0 %v1354
      %1564 = vmatprep.subr.bf16.mxu0 0
      %1565 = vmatpush1.bf16.msra.mxu0 %v1351
      %1566 = vmatprep.subr.bf16.mxu0 0
      %1567 = vmatpush2.bf16.msra.mxu0 0
      %1568 = vmatprep.subr.bf16.mxu0 0
      %1569 = vmatpush2.bf16.msra.mxu0 0
      %1570 = vmatprep.subr.bf16.mxu0 0
      %1571 = vmatpush2.bf16.msra.mxu0 0
      %1572 = vmatprep.subr.bf16.mxu0 0
      %1573 = vmatpush2.bf16.msra.mxu0 0
      %1574 = vmatprep.subr.bf16.mxu0 0
      %1575 = vmatpush2.bf16.msra.mxu0 0
      %1576 = vmatprep.subr.bf16.mxu0 0
      %1577 = vmatpush2.bf16.msra.mxu0 0
      %1578 = vmatprep.subr.bf16.mxu0 0
      %1579 = vmatpush2.bf16.msra.mxu0 0
      %1580 = vmatprep.subr.bf16.mxu0 0
      %1581 = vmatpush2.bf16.msra.mxu0 0
      %1582 = vmatprep.mubr.bf16.mxu0 0
      %1583 = vmatmul.mubr.bf16.gmra.mxu0 %v1508
      %v1584 = vpop.f32.mrf.mxu0
      %v1585 = vadd.f32 0.0, %v1584
      %v1586 = vpop.f32.mrf.mxu0
      %v1587 = vpop.f32.mrf.mxu0
      %v1588 = vpop.f32.mrf.mxu0
      %1589 = vdwg.mxu0
      %v1590 = vadd.f32 %v1505, %v1544
      %v1591 = vadd.f32 %v1506, %v1546
      %v1592 = vxor.u32 %v1590, 2147483648
      %v1593 = vxor.u32 %v1591, 2147483648
      %v1594 = vmul.f32 %v1592, 1.442695
      %v1595 = vpow.pop %v1594
      %v1596 = vmul.f32 %v1593, 1.442695
      %v1597 = vpow.pop %v1596
      %v1598 = vadd.f32 %v1595, 1.0
      %v1599 = vadd.f32 %v1597, 1.0
      %v1600 = vrcp.pop %v1598
      %v1601 = vmul.f32 1.0, %v1600
      %v1602 = vrcp.pop %v1599
      %v1603 = vmul.f32 1.0, %v1602
      %v1604 = vadd.f32 %v1585, %v1496
      %v1605 = vmul.f32 %v1601, %v1604
      %v1606 = vadd.f32 %v1507, %v1605
      %v1607 = vtanh.pop %v1606
      %v1608 = vsub.f32 %v1504, %v1607
      %v1609 = vmul.f32 %v1603, %v1608
      %v1610 = vadd.f32 %v1607, %v1609
      %v1611 = vadd.f32 %v1173, %v941
      %v1612 = vadd.f32 %v1175, %v943
      %v1613 = vadd.f32 %v1244, %v982
      %v1614 = vpack.c.bf16 %v1610, %v1610
      %1615 = vmatprep.subr.bf16.mxu0 %v1371
      %1616 = vmatpush1.bf16.msra.mxu0 %v1370
      %1617 = vmatprep.subr.bf16.mxu0 %v1368
      %1618 = vmatpush1.bf16.msra.mxu0 %v1367
      %1619 = vmatprep.subr.bf16.mxu0 %v1365
      %1620 = vmatpush1.bf16.msra.mxu0 %v1364
      %1621 = vmatprep.subr.bf16.mxu0 %v1362
      %1622 = vmatpush1.bf16.msra.mxu0 %v1361
      %1623 = vmatprep.subr.bf16.mxu0 %v1359
      %1624 = vmatpush1.bf16.msra.mxu0 %v1358
      %1625 = vmatprep.subr.bf16.mxu0 %v1356
      %1626 = vmatpush1.bf16.msra.mxu0 %v1355
      %1627 = vmatprep.subr.bf16.mxu0 %v1353
      %1628 = vmatpush1.bf16.msra.mxu0 %v1352
      %1629 = vmatprep.subr.bf16.mxu0 %v1350
      %1630 = vmatpush1.bf16.msra.mxu0 %v1349
      %1631 = vmatprep.subr.bf16.mxu0 0
      %1632 = vmatpush2.bf16.msra.mxu0 0
      %1633 = vmatprep.subr.bf16.mxu0 0
      %1634 = vmatpush2.bf16.msra.mxu0 0
      %1635 = vmatprep.subr.bf16.mxu0 0
      %1636 = vmatpush2.bf16.msra.mxu0 0
      %1637 = vmatprep.subr.bf16.mxu0 0
      %1638 = vmatpush2.bf16.msra.mxu0 0
      %1639 = vmatprep.subr.bf16.mxu0 0
      %1640 = vmatpush2.bf16.msra.mxu0 0
      %1641 = vmatprep.subr.bf16.mxu0 0
      %1642 = vmatpush2.bf16.msra.mxu0 0
      %1643 = vmatprep.subr.bf16.mxu0 0
      %1644 = vmatpush2.bf16.msra.mxu0 0
      %1645 = vmatprep.subr.bf16.mxu0 0
      %1646 = vmatpush2.bf16.msra.mxu0 0
      %1647 = vmatprep.mubr.bf16.mxu0 0
      %1648 = vmatmul.mubr.bf16.gmra.mxu0 %v1614
      %v1649 = vpop.f32.mrf.mxu0
      %v1650 = vadd.f32 0.0, %v1649
      %v1651 = vpop.f32.mrf.mxu0
      %v1652 = vadd.f32 0.0, %v1651
      %v1653 = vpop.f32.mrf.mxu0
      %v1654 = vpop.f32.mrf.mxu0
      %1655 = vdwg.mxu0
      %1656 = vmatprep.subr.bf16.mxu0 0
      %1657 = vmatpush1.bf16.msra.mxu0 %v1372
      %1658 = vmatprep.subr.bf16.mxu0 0
      %1659 = vmatpush1.bf16.msra.mxu0 %v1369
      %1660 = vmatprep.subr.bf16.mxu0 0
      %1661 = vmatpush1.bf16.msra.mxu0 %v1366
      %1662 = vmatprep.subr.bf16.mxu0 0
      %1663 = vmatpush1.bf16.msra.mxu0 %v1363
      %1664 = vmatprep.subr.bf16.mxu0 0
      %1665 = vmatpush1.bf16.msra.mxu0 %v1360
      %1666 = vmatprep.subr.bf16.mxu0 0
      %1667 = vmatpush1.bf16.msra.mxu0 %v1357
      %1668 = vmatprep.subr.bf16.mxu0 0
      %1669 = vmatpush1.bf16.msra.mxu0 %v1354
      %1670 = vmatprep.subr.bf16.mxu0 0
      %1671 = vmatpush1.bf16.msra.mxu0 %v1351
      %1672 = vmatprep.subr.bf16.mxu0 0
      %1673 = vmatpush2.bf16.msra.mxu0 0
      %1674 = vmatprep.subr.bf16.mxu0 0
      %1675 = vmatpush2.bf16.msra.mxu0 0
      %1676 = vmatprep.subr.bf16.mxu0 0
      %1677 = vmatpush2.bf16.msra.mxu0 0
      %1678 = vmatprep.subr.bf16.mxu0 0
      %1679 = vmatpush2.bf16.msra.mxu0 0
      %1680 = vmatprep.subr.bf16.mxu0 0
      %1681 = vmatpush2.bf16.msra.mxu0 0
      %1682 = vmatprep.subr.bf16.mxu0 0
      %1683 = vmatpush2.bf16.msra.mxu0 0
      %1684 = vmatprep.subr.bf16.mxu0 0
      %1685 = vmatpush2.bf16.msra.mxu0 0
      %1686 = vmatprep.subr.bf16.mxu0 0
      %1687 = vmatpush2.bf16.msra.mxu0 0
      %1688 = vmatprep.mubr.bf16.mxu0 0
      %1689 = vmatmul.mubr.bf16.gmra.mxu0 %v1614
      %v1690 = vpop.f32.mrf.mxu0
      %v1691 = vadd.f32 0.0, %v1690
      %v1692 = vpop.f32.mrf.mxu0
      %v1693 = vpop.f32.mrf.mxu0
      %v1694 = vpop.f32.mrf.mxu0
      %1695 = vdwg.mxu0
      %v1696 = vadd.f32 %v1611, %v1650
      %v1697 = vadd.f32 %v1612, %v1652
      %v1698 = vxor.u32 %v1696, 2147483648
      %v1699 = vxor.u32 %v1697, 2147483648
      %v1700 = vmul.f32 %v1698, 1.442695
      %v1701 = vpow.pop %v1700
      %v1702 = vmul.f32 %v1699, 1.442695
      %v1703 = vpow.pop %v1702
      %v1704 = vadd.f32 %v1701, 1.0
      %v1705 = vadd.f32 %v1703, 1.0
      %v1706 = vrcp.pop %v1704
      %v1707 = vmul.f32 1.0, %v1706
      %v1708 = vrcp.pop %v1705
      %v1709 = vmul.f32 1.0, %v1708
      %v1710 = vadd.f32 %v1691, %v1496
      %v1711 = vmul.f32 %v1707, %v1710
      %v1712 = vadd.f32 %v1613, %v1711
      %v1713 = vtanh.pop %v1712
      %v1714 = vsub.f32 %v1610, %v1713
      %v1715 = vmul.f32 %v1709, %v1714
      %v1716 = vadd.f32 %v1713, %v1715
      %v1717 = vadd.f32 %v1177, %v941
      %v1718 = vadd.f32 %v1179, %v943
      %v1719 = vadd.f32 %v1247, %v982
      %v1720 = vpack.c.bf16 %v1716, %v1716
      %1721 = vmatprep.subr.bf16.mxu0 %v1371
      %1722 = vmatpush1.bf16.msra.mxu0 %v1370
      %1723 = vmatprep.subr.bf16.mxu0 %v1368
      %1724 = vmatpush1.bf16.msra.mxu0 %v1367
      %1725 = vmatprep.subr.bf16.mxu0 %v1365
      %1726 = vmatpush1.bf16.msra.mxu0 %v1364
      %1727 = vmatprep.subr.bf16.mxu0 %v1362
      %1728 = vmatpush1.bf16.msra.mxu0 %v1361
      %1729 = vmatprep.subr.bf16.mxu0 %v1359
      %1730 = vmatpush1.bf16.msra.mxu0 %v1358
      %1731 = vmatprep.subr.bf16.mxu0 %v1356
      %1732 = vmatpush1.bf16.msra.mxu0 %v1355
      %1733 = vmatprep.subr.bf16.mxu0 %v1353
      %1734 = vmatpush1.bf16.msra.mxu0 %v1352
      %1735 = vmatprep.subr.bf16.mxu0 %v1350
      %1736 = vmatpush1.bf16.msra.mxu0 %v1349
      %1737 = vmatprep.subr.bf16.mxu0 0
      %1738 = vmatpush2.bf16.msra.mxu0 0
      %1739 = vmatprep.subr.bf16.mxu0 0
      %1740 = vmatpush2.bf16.msra.mxu0 0
      %1741 = vmatprep.subr.bf16.mxu0 0
      %1742 = vmatpush2.bf16.msra.mxu0 0
      %1743 = vmatprep.subr.bf16.mxu0 0
      %1744 = vmatpush2.bf16.msra.mxu0 0
      %1745 = vmatprep.subr.bf16.mxu0 0
      %1746 = vmatpush2.bf16.msra.mxu0 0
      %1747 = vmatprep.subr.bf16.mxu0 0
      %1748 = vmatpush2.bf16.msra.mxu0 0
      %1749 = vmatprep.subr.bf16.mxu0 0
      %1750 = vmatpush2.bf16.msra.mxu0 0
      %1751 = vmatprep.subr.bf16.mxu0 0
      %1752 = vmatpush2.bf16.msra.mxu0 0
      %1753 = vmatprep.mubr.bf16.mxu0 0
      %1754 = vmatmul.mubr.bf16.gmra.mxu0 %v1720
      %v1755 = vpop.f32.mrf.mxu0
      %v1756 = vadd.f32 0.0, %v1755
      %v1757 = vpop.f32.mrf.mxu0
      %v1758 = vadd.f32 0.0, %v1757
      %v1759 = vpop.f32.mrf.mxu0
      %v1760 = vpop.f32.mrf.mxu0
      %1761 = vdwg.mxu0
      %1762 = vmatprep.subr.bf16.mxu0 0
      %1763 = vmatpush1.bf16.msra.mxu0 %v1372
      %1764 = vmatprep.subr.bf16.mxu0 0
      %1765 = vmatpush1.bf16.msra.mxu0 %v1369
      %1766 = vmatprep.subr.bf16.mxu0 0
      %1767 = vmatpush1.bf16.msra.mxu0 %v1366
      %1768 = vmatprep.subr.bf16.mxu0 0
      %1769 = vmatpush1.bf16.msra.mxu0 %v1363
      %1770 = vmatprep.subr.bf16.mxu0 0
      %1771 = vmatpush1.bf16.msra.mxu0 %v1360
      %1772 = vmatprep.subr.bf16.mxu0 0
      %1773 = vmatpush1.bf16.msra.mxu0 %v1357
      %1774 = vmatprep.subr.bf16.mxu0 0
      %1775 = vmatpush1.bf16.msra.mxu0 %v1354
      %1776 = vmatprep.subr.bf16.mxu0 0
      %1777 = vmatpush1.bf16.msra.mxu0 %v1351
      %1778 = vmatprep.subr.bf16.mxu0 0
      %1779 = vmatpush2.bf16.msra.mxu0 0
      %1780 = vmatprep.subr.bf16.mxu0 0
      %1781 = vmatpush2.bf16.msra.mxu0 0
      %1782 = vmatprep.subr.bf16.mxu0 0
      %1783 = vmatpush2.bf16.msra.mxu0 0
      %1784 = vmatprep.subr.bf16.mxu0 0
      %1785 = vmatpush2.bf16.msra.mxu0 0
      %1786 = vmatprep.subr.bf16.mxu0 0
      %1787 = vmatpush2.bf16.msra.mxu0 0
      %1788 = vmatprep.subr.bf16.mxu0 0
      %1789 = vmatpush2.bf16.msra.mxu0 0
      %1790 = vmatprep.subr.bf16.mxu0 0
      %1791 = vmatpush2.bf16.msra.mxu0 0
      %1792 = vmatprep.subr.bf16.mxu0 0
      %1793 = vmatpush2.bf16.msra.mxu0 0
      %1794 = vmatprep.mubr.bf16.mxu0 0
      %1795 = vmatmul.mubr.bf16.gmra.mxu0 %v1720
      %v1796 = vpop.f32.mrf.mxu0
      %v1797 = vadd.f32 0.0, %v1796
      %v1798 = vpop.f32.mrf.mxu0
      %v1799 = vpop.f32.mrf.mxu0
      %v1800 = vpop.f32.mrf.mxu0
      %1801 = vdwg.mxu0
      %v1802 = vadd.f32 %v1717, %v1756
      %v1803 = vadd.f32 %v1718, %v1758
      %v1804 = vxor.u32 %v1802, 2147483648
      %v1805 = vxor.u32 %v1803, 2147483648
      %v1806 = vmul.f32 %v1804, 1.442695
      %v1807 = vpow.pop %v1806
      %v1808 = vmul.f32 %v1805, 1.442695
      %v1809 = vpow.pop %v1808
      %v1810 = vadd.f32 %v1807, 1.0
      %v1811 = vadd.f32 %v1809, 1.0
      %v1812 = vrcp.pop %v1810
      %v1813 = vmul.f32 1.0, %v1812
      %v1814 = vrcp.pop %v1811
      %v1815 = vmul.f32 1.0, %v1814
      %v1816 = vadd.f32 %v1797, %v1496
      %v1817 = vmul.f32 %v1813, %v1816
      %v1818 = vadd.f32 %v1719, %v1817
      %v1819 = vtanh.pop %v1818
      %v1820 = vsub.f32 %v1716, %v1819
      %v1821 = vmul.f32 %v1815, %v1820
      %v1822 = vadd.f32 %v1819, %v1821
      %v1823 = vadd.f32 %v1183, %v941
      %v1824 = vadd.f32 %v1185, %v943
      %v1825 = vadd.f32 %v1252, %v982
      %v1826 = vpack.c.bf16 %v1822, %v1822
      %1827 = vmatprep.subr.bf16.mxu0 %v1371
      %1828 = vmatpush1.bf16.msra.mxu0 %v1370
      %1829 = vmatprep.subr.bf16.mxu0 %v1368
      %1830 = vmatpush1.bf16.msra.mxu0 %v1367
      %1831 = vmatprep.subr.bf16.mxu0 %v1365
      %1832 = vmatpush1.bf16.msra.mxu0 %v1364
      %1833 = vmatprep.subr.bf16.mxu0 %v1362
      %1834 = vmatpush1.bf16.msra.mxu0 %v1361
      %1835 = vmatprep.subr.bf16.mxu0 %v1359
      %1836 = vmatpush1.bf16.msra.mxu0 %v1358
      %1837 = vmatprep.subr.bf16.mxu0 %v1356
      %1838 = vmatpush1.bf16.msra.mxu0 %v1355
      %1839 = vmatprep.subr.bf16.mxu0 %v1353
      %1840 = vmatpush1.bf16.msra.mxu0 %v1352
      %1841 = vmatprep.subr.bf16.mxu0 %v1350
      %1842 = vmatpush1.bf16.msra.mxu0 %v1349
      %1843 = vmatprep.subr.bf16.mxu0 0
      %1844 = vmatpush2.bf16.msra.mxu0 0
      %1845 = vmatprep.subr.bf16.mxu0 0
      %1846 = vmatpush2.bf16.msra.mxu0 0
      %1847 = vmatprep.subr.bf16.mxu0 0
      %1848 = vmatpush2.bf16.msra.mxu0 0
      %1849 = vmatprep.subr.bf16.mxu0 0
      %1850 = vmatpush2.bf16.msra.mxu0 0
      %1851 = vmatprep.subr.bf16.mxu0 0
      %1852 = vmatpush2.bf16.msra.mxu0 0
      %1853 = vmatprep.subr.bf16.mxu0 0
      %1854 = vmatpush2.bf16.msra.mxu0 0
      %1855 = vmatprep.subr.bf16.mxu0 0
      %1856 = vmatpush2.bf16.msra.mxu0 0
      %1857 = vmatprep.subr.bf16.mxu0 0
      %1858 = vmatpush2.bf16.msra.mxu0 0
      %1859 = vmatprep.mubr.bf16.mxu0 0
      %1860 = vmatmul.mubr.bf16.gmra.mxu0 %v1826
      %v1861 = vpop.f32.mrf.mxu0
      %v1862 = vadd.f32 0.0, %v1861
      %v1863 = vpop.f32.mrf.mxu0
      %v1864 = vadd.f32 0.0, %v1863
      %v1865 = vpop.f32.mrf.mxu0
      %v1866 = vpop.f32.mrf.mxu0
      %1867 = vdwg.mxu0
      %1868 = vmatprep.subr.bf16.mxu0 0
      %1869 = vmatpush1.bf16.msra.mxu0 %v1372
      %1870 = vmatprep.subr.bf16.mxu0 0
      %1871 = vmatpush1.bf16.msra.mxu0 %v1369
      %1872 = vmatprep.subr.bf16.mxu0 0
      %1873 = vmatpush1.bf16.msra.mxu0 %v1366
      %1874 = vmatprep.subr.bf16.mxu0 0
      %1875 = vmatpush1.bf16.msra.mxu0 %v1363
      %1876 = vmatprep.subr.bf16.mxu0 0
      %1877 = vmatpush1.bf16.msra.mxu0 %v1360
      %1878 = vmatprep.subr.bf16.mxu0 0
      %1879 = vmatpush1.bf16.msra.mxu0 %v1357
      %1880 = vmatprep.subr.bf16.mxu0 0
      %1881 = vmatpush1.bf16.msra.mxu0 %v1354
      %1882 = vmatprep.subr.bf16.mxu0 0
      %1883 = vmatpush1.bf16.msra.mxu0 %v1351
      %1884 = vmatprep.subr.bf16.mxu0 0
      %1885 = vmatpush2.bf16.msra.mxu0 0
      %1886 = vmatprep.subr.bf16.mxu0 0
      %1887 = vmatpush2.bf16.msra.mxu0 0
      %1888 = vmatprep.subr.bf16.mxu0 0
      %1889 = vmatpush2.bf16.msra.mxu0 0
      %1890 = vmatprep.subr.bf16.mxu0 0
      %1891 = vmatpush2.bf16.msra.mxu0 0
      %1892 = vmatprep.subr.bf16.mxu0 0
      %1893 = vmatpush2.bf16.msra.mxu0 0
      %1894 = vmatprep.subr.bf16.mxu0 0
      %1895 = vmatpush2.bf16.msra.mxu0 0
      %1896 = vmatprep.subr.bf16.mxu0 0
      %1897 = vmatpush2.bf16.msra.mxu0 0
      %1898 = vmatprep.subr.bf16.mxu0 0
      %1899 = vmatpush2.bf16.msra.mxu0 0
      %1900 = vmatprep.mubr.bf16.mxu0 0
      %1901 = vmatmul.mubr.bf16.gmra.mxu0 %v1826
      %v1902 = vpop.f32.mrf.mxu0
      %v1903 = vadd.f32 0.0, %v1902
      %v1904 = vpop.f32.mrf.mxu0
      %v1905 = vpop.f32.mrf.mxu0
      %v1906 = vpop.f32.mrf.mxu0
      %1907 = vdwg.mxu0
      %v1908 = vadd.f32 %v1823, %v1862
      %v1909 = vadd.f32 %v1824, %v1864
      %v1910 = vxor.u32 %v1908, 2147483648
      %v1911 = vxor.u32 %v1909, 2147483648
      %v1912 = vmul.f32 %v1910, 1.442695
      %v1913 = vpow.pop %v1912
      %v1914 = vmul.f32 %v1911, 1.442695
      %v1915 = vpow.pop %v1914
      %v1916 = vadd.f32 %v1913, 1.0
      %v1917 = vadd.f32 %v1915, 1.0
      %v1918 = vrcp.pop %v1916
      %v1919 = vmul.f32 1.0, %v1918
      %v1920 = vrcp.pop %v1917
      %v1921 = vmul.f32 1.0, %v1920
      %v1922 = vadd.f32 %v1903, %v1496
      %v1923 = vmul.f32 %v1919, %v1922
      %v1924 = vadd.f32 %v1825, %v1923
      %v1925 = vtanh.pop %v1924
      %v1926 = vsub.f32 %v1822, %v1925
      %v1927 = vmul.f32 %v1921, %v1926
      %v1928 = vadd.f32 %v1925, %v1927
      %v1929 = vadd.f32 %v1187, %v941
      %v1930 = vadd.f32 %v1189, %v943
      %v1931 = vadd.f32 %v1255, %v982
      %v1932 = vpack.c.bf16 %v1928, %v1928
      %1933 = vmatprep.subr.bf16.mxu0 %v1371
      %1934 = vmatpush1.bf16.msra.mxu0 %v1370
      %1935 = vmatprep.subr.bf16.mxu0 %v1368
      %1936 = vmatpush1.bf16.msra.mxu0 %v1367
      %1937 = vmatprep.subr.bf16.mxu0 %v1365
      %1938 = vmatpush1.bf16.msra.mxu0 %v1364
      %1939 = vmatprep.subr.bf16.mxu0 %v1362
      %1940 = vmatpush1.bf16.msra.mxu0 %v1361
      %1941 = vmatprep.subr.bf16.mxu0 %v1359
      %1942 = vmatpush1.bf16.msra.mxu0 %v1358
      %1943 = vmatprep.subr.bf16.mxu0 %v1356
      %1944 = vmatpush1.bf16.msra.mxu0 %v1355
      %1945 = vmatprep.subr.bf16.mxu0 %v1353
      %1946 = vmatpush1.bf16.msra.mxu0 %v1352
      %1947 = vmatprep.subr.bf16.mxu0 %v1350
      %1948 = vmatpush1.bf16.msra.mxu0 %v1349
      %1949 = vmatprep.subr.bf16.mxu0 0
      %1950 = vmatpush2.bf16.msra.mxu0 0
      %1951 = vmatprep.subr.bf16.mxu0 0
      %1952 = vmatpush2.bf16.msra.mxu0 0
      %1953 = vmatprep.subr.bf16.mxu0 0
      %1954 = vmatpush2.bf16.msra.mxu0 0
      %1955 = vmatprep.subr.bf16.mxu0 0
      %1956 = vmatpush2.bf16.msra.mxu0 0
      %1957 = vmatprep.subr.bf16.mxu0 0
      %1958 = vmatpush2.bf16.msra.mxu0 0
      %1959 = vmatprep.subr.bf16.mxu0 0
      %1960 = vmatpush2.bf16.msra.mxu0 0
      %1961 = vmatprep.subr.bf16.mxu0 0
      %1962 = vmatpush2.bf16.msra.mxu0 0
      %1963 = vmatprep.subr.bf16.mxu0 0
      %1964 = vmatpush2.bf16.msra.mxu0 0
      %1965 = vmatprep.mubr.bf16.mxu0 0
      %1966 = vmatmul.mubr.bf16.gmra.mxu0 %v1932
      %v1967 = vpop.f32.mrf.mxu0
      %v1968 = vadd.f32 0.0, %v1967
      %v1969 = vpop.f32.mrf.mxu0
      %v1970 = vadd.f32 0.0, %v1969
      %v1971 = vpop.f32.mrf.mxu0
      %v1972 = vpop.f32.mrf.mxu0
      %1973 = vdwg.mxu0
      %1974 = vmatprep.subr.bf16.mxu0 0
      %1975 = vmatpush1.bf16.msra.mxu0 %v1372
      %1976 = vmatprep.subr.bf16.mxu0 0
      %1977 = vmatpush1.bf16.msra.mxu0 %v1369
      %1978 = vmatprep.subr.bf16.mxu0 0
      %1979 = vmatpush1.bf16.msra.mxu0 %v1366
      %1980 = vmatprep.subr.bf16.mxu0 0
      %1981 = vmatpush1.bf16.msra.mxu0 %v1363
      %1982 = vmatprep.subr.bf16.mxu0 0
      %1983 = vmatpush1.bf16.msra.mxu0 %v1360
      %1984 = vmatprep.subr.bf16.mxu0 0
      %1985 = vmatpush1.bf16.msra.mxu0 %v1357
      %1986 = vmatprep.subr.bf16.mxu0 0
      %1987 = vmatpush1.bf16.msra.mxu0 %v1354
      %1988 = vmatprep.subr.bf16.mxu0 0
      %1989 = vmatpush1.bf16.msra.mxu0 %v1351
      %1990 = vmatprep.subr.bf16.mxu0 0
      %1991 = vmatpush2.bf16.msra.mxu0 0
      %1992 = vmatprep.subr.bf16.mxu0 0
      %1993 = vmatpush2.bf16.msra.mxu0 0
      %1994 = vmatprep.subr.bf16.mxu0 0
      %1995 = vmatpush2.bf16.msra.mxu0 0
      %1996 = vmatprep.subr.bf16.mxu0 0
      %1997 = vmatpush2.bf16.msra.mxu0 0
      %1998 = vmatprep.subr.bf16.mxu0 0
      %1999 = vmatpush2.bf16.msra.mxu0 0
      %2000 = vmatprep.subr.bf16.mxu0 0
      %2001 = vmatpush2.bf16.msra.mxu0 0
      %2002 = vmatprep.subr.bf16.mxu0 0
      %2003 = vmatpush2.bf16.msra.mxu0 0
      %2004 = vmatprep.subr.bf16.mxu0 0
      %2005 = vmatpush2.bf16.msra.mxu0 0
      %2006 = vmatprep.mubr.bf16.mxu0 0
      %2007 = vmatmul.mubr.bf16.gmra.mxu0 %v1932
      %v2008 = vpop.f32.mrf.mxu0
      %v2009 = vadd.f32 0.0, %v2008
      %v2010 = vpop.f32.mrf.mxu0
      %v2011 = vpop.f32.mrf.mxu0
      %v2012 = vpop.f32.mrf.mxu0
      %2013 = vdwg.mxu0
      %v2014 = vadd.f32 %v1929, %v1968
      %v2015 = vadd.f32 %v1930, %v1970
      %v2016 = vxor.u32 %v2014, 2147483648
      %v2017 = vxor.u32 %v2015, 2147483648
      %v2018 = vmul.f32 %v2016, 1.442695
      %v2019 = vpow.pop %v2018
      %v2020 = vmul.f32 %v2017, 1.442695
      %v2021 = vpow.pop %v2020
      %v2022 = vadd.f32 %v2019, 1.0
      %v2023 = vadd.f32 %v2021, 1.0
      %v2024 = vrcp.pop %v2022
      %v2025 = vmul.f32 1.0, %v2024
      %v2026 = vrcp.pop %v2023
      %v2027 = vmul.f32 1.0, %v2026
      %v2028 = vadd.f32 %v2009, %v1496
      %v2029 = vmul.f32 %v2025, %v2028
      %v2030 = vadd.f32 %v1931, %v2029
      %v2031 = vtanh.pop %v2030
      %v2032 = vsub.f32 %v1928, %v2031
      %v2033 = vmul.f32 %v2027, %v2032
      %v2034 = vadd.f32 %v2031, %v2033
      %v2035 = vadd.f32 %v1193, %v941
      %v2036 = vadd.f32 %v1195, %v943
      %v2037 = vadd.f32 %v1260, %v982
      %v2038 = vpack.c.bf16 %v2034, %v2034
      %2039 = vmatprep.subr.bf16.mxu0 %v1371
      %2040 = vmatpush1.bf16.msra.mxu0 %v1370
      %2041 = vmatprep.subr.bf16.mxu0 %v1368
      %2042 = vmatpush1.bf16.msra.mxu0 %v1367
      %2043 = vmatprep.subr.bf16.mxu0 %v1365
      %2044 = vmatpush1.bf16.msra.mxu0 %v1364
      %2045 = vmatprep.subr.bf16.mxu0 %v1362
      %2046 = vmatpush1.bf16.msra.mxu0 %v1361
      %2047 = vmatprep.subr.bf16.mxu0 %v1359
      %2048 = vmatpush1.bf16.msra.mxu0 %v1358
      %2049 = vmatprep.subr.bf16.mxu0 %v1356
      %2050 = vmatpush1.bf16.msra.mxu0 %v1355
      %2051 = vmatprep.subr.bf16.mxu0 %v1353
      %2052 = vmatpush1.bf16.msra.mxu0 %v1352
      %2053 = vmatprep.subr.bf16.mxu0 %v1350
      %2054 = vmatpush1.bf16.msra.mxu0 %v1349
      %2055 = vmatprep.subr.bf16.mxu0 0
      %2056 = vmatpush2.bf16.msra.mxu0 0
      %2057 = vmatprep.subr.bf16.mxu0 0
      %2058 = vmatpush2.bf16.msra.mxu0 0
      %2059 = vmatprep.subr.bf16.mxu0 0
      %2060 = vmatpush2.bf16.msra.mxu0 0
      %2061 = vmatprep.subr.bf16.mxu0 0
      %2062 = vmatpush2.bf16.msra.mxu0 0
      %2063 = vmatprep.subr.bf16.mxu0 0
      %2064 = vmatpush2.bf16.msra.mxu0 0
      %2065 = vmatprep.subr.bf16.mxu0 0
      %2066 = vmatpush2.bf16.msra.mxu0 0
      %2067 = vmatprep.subr.bf16.mxu0 0
      %2068 = vmatpush2.bf16.msra.mxu0 0
      %2069 = vmatprep.subr.bf16.mxu0 0
      %2070 = vmatpush2.bf16.msra.mxu0 0
      %2071 = vmatprep.mubr.bf16.mxu0 0
      %2072 = vmatmul.mubr.bf16.gmra.mxu0 %v2038
      %v2073 = vpop.f32.mrf.mxu0
      %v2074 = vadd.f32 0.0, %v2073
      %v2075 = vpop.f32.mrf.mxu0
      %v2076 = vadd.f32 0.0, %v2075
      %v2077 = vpop.f32.mrf.mxu0
      %v2078 = vpop.f32.mrf.mxu0
      %2079 = vdwg.mxu0
      %2080 = vmatprep.subr.bf16.mxu0 0
      %2081 = vmatpush1.bf16.msra.mxu0 %v1372
      %2082 = vmatprep.subr.bf16.mxu0 0
      %2083 = vmatpush1.bf16.msra.mxu0 %v1369
      %2084 = vmatprep.subr.bf16.mxu0 0
      %2085 = vmatpush1.bf16.msra.mxu0 %v1366
      %2086 = vmatprep.subr.bf16.mxu0 0
      %2087 = vmatpush1.bf16.msra.mxu0 %v1363
      %2088 = vmatprep.subr.bf16.mxu0 0
      %2089 = vmatpush1.bf16.msra.mxu0 %v1360
      %2090 = vmatprep.subr.bf16.mxu0 0
      %2091 = vmatpush1.bf16.msra.mxu0 %v1357
      %2092 = vmatprep.subr.bf16.mxu0 0
      %2093 = vmatpush1.bf16.msra.mxu0 %v1354
      %2094 = vmatprep.subr.bf16.mxu0 0
      %2095 = vmatpush1.bf16.msra.mxu0 %v1351
      %2096 = vmatprep.subr.bf16.mxu0 0
      %2097 = vmatpush2.bf16.msra.mxu0 0
      %2098 = vmatprep.subr.bf16.mxu0 0
      %2099 = vmatpush2.bf16.msra.mxu0 0
      %2100 = vmatprep.subr.bf16.mxu0 0
      %2101 = vmatpush2.bf16.msra.mxu0 0
      %2102 = vmatprep.subr.bf16.mxu0 0
      %2103 = vmatpush2.bf16.msra.mxu0 0
      %2104 = vmatprep.subr.bf16.mxu0 0
      %2105 = vmatpush2.bf16.msra.mxu0 0
      %2106 = vmatprep.subr.bf16.mxu0 0
      %2107 = vmatpush2.bf16.msra.mxu0 0
      %2108 = vmatprep.subr.bf16.mxu0 0
      %2109 = vmatpush2.bf16.msra.mxu0 0
      %2110 = vmatprep.subr.bf16.mxu0 0
      %2111 = vmatpush2.bf16.msra.mxu0 0
      %2112 = vmatprep.mubr.bf16.mxu0 0
      %2113 = vmatmul.mubr.bf16.gmra.mxu0 %v2038
      %v2114 = vpop.f32.mrf.mxu0
      %v2115 = vadd.f32 0.0, %v2114
      %v2116 = vpop.f32.mrf.mxu0
      %v2117 = vpop.f32.mrf.mxu0
      %v2118 = vpop.f32.mrf.mxu0
      %2119 = vdwg.mxu0
      %v2120 = vadd.f32 %v2035, %v2074
      %v2121 = vadd.f32 %v2036, %v2076
      %v2122 = vxor.u32 %v2120, 2147483648
      %v2123 = vxor.u32 %v2121, 2147483648
      %v2124 = vmul.f32 %v2122, 1.442695
      %v2125 = vpow.pop %v2124
      %v2126 = vmul.f32 %v2123, 1.442695
      %v2127 = vpow.pop %v2126
      %v2128 = vadd.f32 %v2125, 1.0
      %v2129 = vadd.f32 %v2127, 1.0
      %v2130 = vrcp.pop %v2128
      %v2131 = vmul.f32 1.0, %v2130
      %v2132 = vrcp.pop %v2129
      %v2133 = vmul.f32 1.0, %v2132
      %v2134 = vadd.f32 %v2115, %v1496
      %v2135 = vmul.f32 %v2131, %v2134
      %v2136 = vadd.f32 %v2037, %v2135
      %v2137 = vtanh.pop %v2136
      %v2138 = vsub.f32 %v2034, %v2137
      %v2139 = vmul.f32 %v2133, %v2138
      %v2140 = vadd.f32 %v2137, %v2139
      %v2141 = vadd.f32 %v1197, %v941
      %v2142 = vadd.f32 %v1199, %v943
      %v2143 = vadd.f32 %v1263, %v982
      %v2144 = vpack.c.bf16 %v2140, %v2140
      %2145 = vmatprep.subr.bf16.mxu0 %v1371
      %2146 = vmatpush1.bf16.msra.mxu0 %v1370
      %2147 = vmatprep.subr.bf16.mxu0 %v1368
      %2148 = vmatpush1.bf16.msra.mxu0 %v1367
      %2149 = vmatprep.subr.bf16.mxu0 %v1365
      %2150 = vmatpush1.bf16.msra.mxu0 %v1364
      %2151 = vmatprep.subr.bf16.mxu0 %v1362
      %2152 = vmatpush1.bf16.msra.mxu0 %v1361
      %2153 = vmatprep.subr.bf16.mxu0 %v1359
      %2154 = vmatpush1.bf16.msra.mxu0 %v1358
      %2155 = vmatprep.subr.bf16.mxu0 %v1356
      %2156 = vmatpush1.bf16.msra.mxu0 %v1355
      %2157 = vmatprep.subr.bf16.mxu0 %v1353
      %2158 = vmatpush1.bf16.msra.mxu0 %v1352
      %2159 = vmatprep.subr.bf16.mxu0 %v1350
      %2160 = vmatpush1.bf16.msra.mxu0 %v1349
      %2161 = vmatprep.subr.bf16.mxu0 0
      %2162 = vmatpush2.bf16.msra.mxu0 0
      %2163 = vmatprep.subr.bf16.mxu0 0
      %2164 = vmatpush2.bf16.msra.mxu0 0
      %2165 = vmatprep.subr.bf16.mxu0 0
      %2166 = vmatpush2.bf16.msra.mxu0 0
      %2167 = vmatprep.subr.bf16.mxu0 0
      %2168 = vmatpush2.bf16.msra.mxu0 0
      %2169 = vmatprep.subr.bf16.mxu0 0
      %2170 = vmatpush2.bf16.msra.mxu0 0
      %2171 = vmatprep.subr.bf16.mxu0 0
      %2172 = vmatpush2.bf16.msra.mxu0 0
      %2173 = vmatprep.subr.bf16.mxu0 0
      %2174 = vmatpush2.bf16.msra.mxu0 0
      %2175 = vmatprep.subr.bf16.mxu0 0
      %2176 = vmatpush2.bf16.msra.mxu0 0
      %2177 = vmatprep.mubr.bf16.mxu0 0
      %2178 = vmatmul.mubr.bf16.gmra.mxu0 %v2144
      %v2179 = vpop.f32.mrf.mxu0
      %v2180 = vadd.f32 0.0, %v2179
      %v2181 = vpop.f32.mrf.mxu0
      %v2182 = vadd.f32 0.0, %v2181
      %v2183 = vpop.f32.mrf.mxu0
      %v2184 = vpop.f32.mrf.mxu0
      %2185 = vdwg.mxu0
      %2186 = vmatprep.subr.bf16.mxu0 0
      %2187 = vmatpush1.bf16.msra.mxu0 %v1372
      %2188 = vmatprep.subr.bf16.mxu0 0
      %2189 = vmatpush1.bf16.msra.mxu0 %v1369
      %2190 = vmatprep.subr.bf16.mxu0 0
      %2191 = vmatpush1.bf16.msra.mxu0 %v1366
      %2192 = vmatprep.subr.bf16.mxu0 0
      %2193 = vmatpush1.bf16.msra.mxu0 %v1363
      %2194 = vmatprep.subr.bf16.mxu0 0
      %2195 = vmatpush1.bf16.msra.mxu0 %v1360
      %2196 = vmatprep.subr.bf16.mxu0 0
      %2197 = vmatpush1.bf16.msra.mxu0 %v1357
      %2198 = vmatprep.subr.bf16.mxu0 0
      %2199 = vmatpush1.bf16.msra.mxu0 %v1354
      %2200 = vmatprep.subr.bf16.mxu0 0
      %2201 = vmatpush1.bf16.msra.mxu0 %v1351
      %2202 = vmatprep.subr.bf16.mxu0 0
      %2203 = vmatpush2.bf16.msra.mxu0 0
      %2204 = vmatprep.subr.bf16.mxu0 0
      %2205 = vmatpush2.bf16.msra.mxu0 0
      %2206 = vmatprep.subr.bf16.mxu0 0
      %2207 = vmatpush2.bf16.msra.mxu0 0
      %2208 = vmatprep.subr.bf16.mxu0 0
      %2209 = vmatpush2.bf16.msra.mxu0 0
      %2210 = vmatprep.subr.bf16.mxu0 0
      %2211 = vmatpush2.bf16.msra.mxu0 0
      %2212 = vmatprep.subr.bf16.mxu0 0
      %2213 = vmatpush2.bf16.msra.mxu0 0
      %2214 = vmatprep.subr.bf16.mxu0 0
      %2215 = vmatpush2.bf16.msra.mxu0 0
      %2216 = vmatprep.subr.bf16.mxu0 0
      %2217 = vmatpush2.bf16.msra.mxu0 0
      %2218 = vmatprep.mubr.bf16.mxu0 0
      %2219 = vmatmul.mubr.bf16.gmra.mxu0 %v2144
      %v2220 = vpop.f32.mrf.mxu0
      %v2221 = vadd.f32 0.0, %v2220
      %v2222 = vpop.f32.mrf.mxu0
      %v2223 = vpop.f32.mrf.mxu0
      %v2224 = vpop.f32.mrf.mxu0
      %2225 = vdwg.mxu0
      %v2226 = vadd.f32 %v2141, %v2180
      %v2227 = vadd.f32 %v2142, %v2182
      %v2228 = vxor.u32 %v2226, 2147483648
      %v2229 = vxor.u32 %v2227, 2147483648
      %v2230 = vmul.f32 %v2228, 1.442695
      %v2231 = vpow.pop %v2230
      %v2232 = vmul.f32 %v2229, 1.442695
      %v2233 = vpow.pop %v2232
      %v2234 = vadd.f32 %v2231, 1.0
      %v2235 = vadd.f32 %v2233, 1.0
      %v2236 = vrcp.pop %v2234
      %v2237 = vmul.f32 1.0, %v2236
      %v2238 = vrcp.pop %v2235
      %v2239 = vmul.f32 1.0, %v2238
      %v2240 = vadd.f32 %v2221, %v1496
      %v2241 = vmul.f32 %v2237, %v2240
      %v2242 = vadd.f32 %v2143, %v2241
      %v2243 = vtanh.pop %v2242
      %v2244 = vsub.f32 %v2140, %v2243
      %v2245 = vmul.f32 %v2239, %v2244
      %v2246 = vadd.f32 %v2243, %v2245
      %v2247 = vtanh.pop %v2246
      %v2248 = vld [vmem:[%s9] sm:$0xff]
      %v2249 = vld [vmem:[%s9 + $0x8] sm:$0xff]
      %v2250 = vld [vmem:[%s9 + $0x10] sm:$0xff]
      %v2251 = vld [vmem:[%s9 + $0x18] sm:$0xff]
      %v2252 = vld [vmem:[%s9 + $0x20] sm:$0xff]
      %v2253 = vld [vmem:[%s9 + $0x28] sm:$0xff]
      %v2254 = vld [vmem:[%s9 + $0x30] sm:$0xff]
      %v2255 = vld [vmem:[%s9 + $0x38] sm:$0xff]
      %v2256 = vld [vmem:[%s9 + $0x40] sm:$0xff]
      %v2257 = vld [vmem:[%s9 + $0x48] sm:$0xff]
      %v2258 = vld [vmem:[%s9 + $0x50] sm:$0xff]
      %v2259 = vld [vmem:[%s9 + $0x58] sm:$0xff]
      %v2260 = vld [vmem:[%s9 + $0x60] sm:$0xff]
      %v2261 = vld [vmem:[%s9 + $0x68] sm:$0xff]
      %v2262 = vld [vmem:[%s9 + $0x70] sm:$0xff]
      %v2263 = vld [vmem:[%s9 + $0x78] sm:$0xff]
      %v2264 = vld [vmem:[%s446] sm:$0xff]
      %v2265 = vtanh.pop %v2264
      %v2266 = vld [vmem:[%s10] sm:$0x7]
      %vm2267 = vcmask 23552
      %v2269 = vsel %vm2267, %v2265, 0
      %vm2271 = vcmask 1042432
      %v2273 = vsel %vm2271, %v2266, 0
      %2275 = vmatprep.subr.mxu0 0.0
      %2276 = vmatpush1.msra.mxu0 0.0
      %2277 = vmatprep.subr.mxu0 0.0
      %2278 = vmatpush1.msra.mxu0 0.0
      %2279 = vmatprep.subr.mxu0 0.0
      %2280 = vmatpush1.msra.mxu0 0.0
      %2281 = vmatprep.subr.mxu0 0.0
      %2282 = vmatpush1.msra.mxu0 0.0
      %2283 = vmatprep.subr.mxu0 0.0
      %2284 = vmatpush1.msra.mxu0 0.0
      %2285 = vmatprep.subr.mxu0 0.0
      %2286 = vmatpush1.msra.mxu0 0.0
      %2287 = vmatprep.subr.mxu0 0.0
      %2288 = vmatpush1.msra.mxu0 0.0
      %2289 = vmatprep.subr.mxu0 0.0
      %2290 = vmatpush1.msra.mxu0 0.0
      %2291 = vmatprep.subr.mxu0 0.0
      %2292 = vmatpush1.msra.mxu0 0.0
      %2293 = vmatprep.subr.mxu0 0.0
      %2294 = vmatpush1.msra.mxu0 0.0
      %2295 = vmatprep.subr.mxu0 0.0
      %2296 = vmatpush1.msra.mxu0 0.0
      %2297 = vmatprep.subr.mxu0 0.0
      %2298 = vmatpush1.msra.mxu0 0.0
      %2299 = vmatprep.subr.mxu0 0.0
      %2300 = vmatpush1.msra.mxu0 0.0
      %2301 = vmatprep.subr.mxu0 0.0
      %2302 = vmatpush1.msra.mxu0 0.0
      %2303 = vmatprep.subr.mxu0 0.0
      %2304 = vmatpush1.msra.mxu0 0.0
      %2305 = vmatprep.subr.mxu0 0.0
      %2306 = vmatpush1.msra.mxu0 %v2273
      %2307 = vmatprep.subr.mxu0 0.0
      %2308 = vmatpush2.msra.mxu0 0.0
      %2309 = vmatprep.subr.mxu0 0.0
      %2310 = vmatpush2.msra.mxu0 0.0
      %2311 = vmatprep.subr.mxu0 0.0
      %2312 = vmatpush2.msra.mxu0 0.0
      %2313 = vmatprep.subr.mxu0 0.0
      %2314 = vmatpush2.msra.mxu0 0.0
      %2315 = vmatprep.subr.mxu0 0.0
      %2316 = vmatpush2.msra.mxu0 0.0
      %2317 = vmatprep.subr.mxu0 0.0
      %2318 = vmatpush2.msra.mxu0 0.0
      %2319 = vmatprep.subr.mxu0 0.0
      %2320 = vmatpush2.msra.mxu0 0.0
      %2321 = vmatprep.subr.mxu0 0.0
      %2322 = vmatpush2.msra.mxu0 0.0
      %2323 = vmatprep.subr.mxu0 0.0
      %2324 = vmatpush2.msra.mxu0 0.0
      %2325 = vmatprep.subr.mxu0 0.0
      %2326 = vmatpush2.msra.mxu0 0.0
      %2327 = vmatprep.subr.mxu0 0.0
      %2328 = vmatpush2.msra.mxu0 0.0
      %2329 = vmatprep.subr.mxu0 0.0
      %2330 = vmatpush2.msra.mxu0 0.0
      %2331 = vmatprep.subr.mxu0 0.0
      %2332 = vmatpush2.msra.mxu0 0.0
      %2333 = vmatprep.subr.mxu0 0.0
      %2334 = vmatpush2.msra.mxu0 0.0
      %2335 = vmatprep.subr.mxu0 0.0
      %2336 = vmatpush2.msra.mxu0 0.0
      %2337 = vmatprep.subr.mxu0 0.0
      %2338 = vmatpush2.msra.mxu0 0.0
      %2339 = vmatprep.mubr.f32.mxu0 0.0
      %2340 = vmatmul.mubr.f32.gmra.mxu0 %v2269
      %v2341 = vpop.f32.mrf.mxu0
      %v2342 = vadd.f32 0.0, %v2341
      %v2343 = vpop.f32.mrf.mxu0
      %2344 = vdwg.mxu0
      %2345 = vmatprep.subr.mxu0 0.0
      %2346 = vmatpush1.msra.mxu0 %v2263
      %2347 = vmatprep.subr.mxu0 0.0
      %2348 = vmatpush1.msra.mxu0 %v2262
      %2349 = vmatprep.subr.mxu0 0.0
      %2350 = vmatpush1.msra.mxu0 %v2261
      %2351 = vmatprep.subr.mxu0 0.0
      %2352 = vmatpush1.msra.mxu0 %v2260
      %2353 = vmatprep.subr.mxu0 0.0
      %2354 = vmatpush1.msra.mxu0 %v2259
      %2355 = vmatprep.subr.mxu0 0.0
      %2356 = vmatpush1.msra.mxu0 %v2258
      %2357 = vmatprep.subr.mxu0 0.0
      %2358 = vmatpush1.msra.mxu0 %v2257
      %2359 = vmatprep.subr.mxu0 0.0
      %2360 = vmatpush1.msra.mxu0 %v2256
      %2361 = vmatprep.subr.mxu0 0.0
      %2362 = vmatpush1.msra.mxu0 %v2255
      %2363 = vmatprep.subr.mxu0 0.0
      %2364 = vmatpush1.msra.mxu0 %v2254
      %2365 = vmatprep.subr.mxu0 0.0
      %2366 = vmatpush1.msra.mxu0 %v2253
      %2367 = vmatprep.subr.mxu0 0.0
      %2368 = vmatpush1.msra.mxu0 %v2252
      %2369 = vmatprep.subr.mxu0 0.0
      %2370 = vmatpush1.msra.mxu0 %v2251
      %2371 = vmatprep.subr.mxu0 0.0
      %2372 = vmatpush1.msra.mxu0 %v2250
      %2373 = vmatprep.subr.mxu0 0.0
      %2374 = vmatpush1.msra.mxu0 %v2249
      %2375 = vmatprep.subr.mxu0 0.0
      %2376 = vmatpush1.msra.mxu0 %v2248
      %2377 = vmatprep.subr.mxu0 0.0
      %2378 = vmatpush2.msra.mxu0 0.0
      %2379 = vmatprep.subr.mxu0 0.0
      %2380 = vmatpush2.msra.mxu0 0.0
      %2381 = vmatprep.subr.mxu0 0.0
      %2382 = vmatpush2.msra.mxu0 0.0
      %2383 = vmatprep.subr.mxu0 0.0
      %2384 = vmatpush2.msra.mxu0 0.0
      %2385 = vmatprep.subr.mxu0 0.0
      %2386 = vmatpush2.msra.mxu0 0.0
      %2387 = vmatprep.subr.mxu0 0.0
      %2388 = vmatpush2.msra.mxu0 0.0
      %2389 = vmatprep.subr.mxu0 0.0
      %2390 = vmatpush2.msra.mxu0 0.0
      %2391 = vmatprep.subr.mxu0 0.0
      %2392 = vmatpush2.msra.mxu0 0.0
      %2393 = vmatprep.subr.mxu0 0.0
      %2394 = vmatpush2.msra.mxu0 0.0
      %2395 = vmatprep.subr.mxu0 0.0
      %2396 = vmatpush2.msra.mxu0 0.0
      %2397 = vmatprep.subr.mxu0 0.0
      %2398 = vmatpush2.msra.mxu0 0.0
      %2399 = vmatprep.subr.mxu0 0.0
      %2400 = vmatpush2.msra.mxu0 0.0
      %2401 = vmatprep.subr.mxu0 0.0
      %2402 = vmatpush2.msra.mxu0 0.0
      %2403 = vmatprep.subr.mxu0 0.0
      %2404 = vmatpush2.msra.mxu0 0.0
      %2405 = vmatprep.subr.mxu0 0.0
      %2406 = vmatpush2.msra.mxu0 0.0
      %2407 = vmatprep.subr.mxu0 0.0
      %2408 = vmatpush2.msra.mxu0 0.0
      %2409 = vmatprep.mubr.f32.mxu0 0.0
      %2410 = vmatmul.mubr.f32.gmra.mxu0 %v2247
      %v2411 = vpop.f32.mrf.mxu0
      %v2412 = vadd.f32 %v2342, %v2411
      %v2413 = vpop.f32.mrf.mxu0
      %2414 = vdwg.mxu0
      %v2415 = vld [vmem:[%s11] sm:$0x1]
      %v2417 = vlaneseq
      %v2418 = vshrl.u32 %v2417, 7
      %v2419 = vsub.s32 0, %v2418
      %v2420 = vrot.slane %v2415, %v2419
      %v2422 = vadd.f32 %v2412, %v2420
      %vm2423 = vcmask 15360
      %2424 = vst.msk [vmem:[%s450] sm:$0xff] %vm2423, %v2422
      %p2425 = scmp.lt.s32.totalorder %s23, 1
      %s2426 = scalar_select %p2425, %s23, 1
      %s2427 = smul.addr %s2426, 8
      %s2428 = scalar_lea.vmem %s12, %s2427
      // Predicated region
      $region69: #{rnn_forward.1} parent=67 // pred_check
        %p2429 = pneg %p308
      $region70: #{rnn_forward.1} parent=67 // pred_check_branch
        %2431 = sbr.rel (%p2429) target = $region72
      $region71: #{rnn_forward.1} parent=67 // pred_region
        _
      $region72: #{rnn_forward.1} parent=67 // pred_fallthru
        _
    $region68: #{rnn_forward.1} parent=5 // pred_fallthru
      _
    %p2432 = scmp.le.s32.totalorder 2, %s18
    // Predicated region
    $region73: #{rnn_forward.1} parent=5 // pred_check
      %p2433 = pneg %p2432
    $region74: #{rnn_forward.1} parent=5 // pred_check_branch
      %2435 = sbr.rel (%p2433) target = $region76
    $region75: #{rnn_forward.1} parent=5 // pred_region
      %s2436 = ssub.s32 %s18, 2
      // Predicated region
      $region77: #{rnn_forward.1} parent=75 // pred_check
        %p2437 = pneg %p314
      $region78: #{rnn_forward.1} parent=75 // pred_check_branch
        %2439 = sbr.rel (%p2437) target = $region80
      $region79: #{rnn_forward.1} parent=75 // pred_region
        %p2440 = scmp.lt.s32.totalorder %s24, 1
        %s2441 = scalar_select %p2440, %s24, 1
        %s2442 = smul.addr %s2441, 8
        %s2443 = scalar_lea.vmem %s12, %s2442
      $region80: #{rnn_forward.1} parent=75 // pred_fallthru
        _
    $region76: #{rnn_forward.1} parent=5 // pred_fallthru
      _
  $region6: #{rnn_forward.1} parent=0 // loop_footer
    %s22 = sadd.s32 1, %s18
  $region7: #{rnn_forward.1} parent=0 // loop_footer_branch
    %17 = sbr.rel target = $region3
  $region8: #{rnn_forward.1} parent=0 // loop_exit
    _

</llo_original>
